<compile_context>
chip_gen: v6e
topology: v6e:2x2x1
jax: 0.10.0
libtpu: 0.0.40
codegen_flags: <defaults>
</compile_context>

<pallas_src>
import jax
import jax.numpy as jnp
import numpy as np
from jax import lax
from jax.experimental import pallas as pl
from jax.experimental.pallas import tpu as pltpu


def _round_up(x, m):
    return ((x + m - 1) // m) * m


# ----------------------------- Pallas kernel --------------------------------

def char_gru_kernel(ids_ref, gtab_ref, whh_ref, bhn_ref, out_ref, gi_scr):
    T2, tile_n = ids_ref.shape            # ids rows: [fwd time order ; reversed+V]
    T = T2 // 2
    V2p, G3 = gtab_ref.shape              # padded one-hot width, 3 * Gp
    Gp = G3 // 3                          # padded fused [fwd|bwd|0] state width
    mm_dtype = gtab_ref.dtype             # f32, or bf16 when use_bf16_matmul

    # ---- hoisted phase: embedding lookup + input projection (+ b_ih and the
    # r/z parts of b_hh) for BOTH directions and ALL timesteps, realized as a
    # SINGLE (T*tile_n, V2p) @ (V2p, 3*Gp) one-hot matmul on the MXU.  The
    # backward ids are already time-reversed and offset by V in the wrapper,
    # so no gather / reverse is needed here.  None of this sits on the serial
    # h-dependence chain. --------------------------------------------------
    ids = ids_ref[...]                                       # (2T, tile_n) int32
    iota_v = lax.broadcasted_iota(jnp.int32, (T, tile_n, V2p), 2)
    oh = ((iota_v == ids[:T, :, None]) |
          (iota_v == ids[T:, :, None])).astype(mm_dtype)     # (T, tile_n, V2p)
    gi = jnp.dot(oh.reshape(T * tile_n, V2p), gtab_ref[...],
                 preferred_element_type=jnp.float32)         # (T*tile_n, 3*Gp)
    gi_scr[...] = gi.reshape(T, tile_n, G3).astype(gi_scr.dtype)

    whh = whh_ref[...]                                       # (Gp, 3*Gp) block-diag W_hh^T
    # n-gate b_hh broadcast hoisted out of the recurrence loop.
    bhn = jnp.broadcast_to(bhn_ref[...], (tile_n, Gp)).astype(jnp.float32)

    # ---- fused bidirectional GRU recurrence (PyTorch gate order r, z, n) ----
    # State h = [h_fwd | h_bwd | 0-padding].  The padding lanes stay exactly 0
    # through the update (gi/gh/bhn are 0 there => r=z=0.5, n=0, h_new=0), so
    # the final state is stored directly as the lane-dense output slab.
    h = jnp.zeros((tile_n, Gp), jnp.float32)
    for t in range(T):                                       # static, small -> unrolled
        gi_t = gi_scr[t].astype(jnp.float32)                 # (tile_n, 3*Gp)
        gh = jnp.dot(h.astype(mm_dtype), whh,
                     preferred_element_type=jnp.float32)     # (tile_n, 3*Gp)
        r = jax.nn.sigmoid(gi_t[:, :Gp] + gh[:, :Gp])
        z = jax.nn.sigmoid(gi_t[:, Gp:2 * Gp] + gh[:, Gp:2 * Gp])
        n = jnp.tanh(gi_t[:, 2 * Gp:] + r * (gh[:, 2 * Gp:] + bhn))
        h = n + z * (h - n)                                  # == (1-z)*n + z*h
    out_ref[...] = h.astype(out_ref.dtype)


# ------------------------------ wrapper --------------------------------------

def char_embedding_forward(char_ids, params, *, hidden_size, tile_n=1024,
                           use_bf16_matmul=True, vmem_budget_bytes=24 << 20):
    """char_ids: (batch, seq_len, word_len) int32. Returns (batch, seq_len, 2*H).

    use_bf16_matmul: bf16 MXU operands (f32 accumulation, f32 gate math) --
    full-rate MXU on all generations; set False for bit-tight f32 matmuls.
    vmem_budget_bytes: cap on the tile-dependent VMEM working set (conservative
    for v7x's 64 MiB VMEM / 32 MiB scoped default).
    """
    batch, seq_len, word_len = char_ids.shape
    N = batch * seq_len
    T = word_len
    H = hidden_size

    emb = params["char_emb"].astype(jnp.float32)             # (V, E)
    V = emb.shape[0]
    V2p = _round_up(2 * V, 128)        # padded one-hot lane width (fwd block | bwd block | 0)
    Gp = _round_up(2 * H, 128)         # padded fused gate-group / state width [fwd|bwd|0]
    G3 = 3 * Gp

    # --- fold embedding lookup + x @ W_ih^T + b_ih + b_hh(r,z) into one table.
    # The n-gate b_hh must stay inside r*(W_hn h + b_hn), so it is NOT folded.
    def dir_tab(wih, bih, bhh):                               # (3H,E),(3H,),(3H,)
        t = emb @ wih.astype(jnp.float32).T + bih.astype(jnp.float32)[None, :]
        return t.at[:, :2 * H].add(bhh.astype(jnp.float32)[None, :2 * H])

    tf = dir_tab(params["weight_ih_f"], params["bias_ih_f"], params["bias_hh_f"])
    tb = dir_tab(params["weight_ih_b"], params["bias_ih_b"], params["bias_hh_b"])

    whf = params["weight_hh_f"].astype(jnp.float32)           # (3H, H) rows [r; z; n]
    whb = params["weight_hh_b"].astype(jnp.float32)

    # Padded fused gi table (V2p, 3*Gp) and block-diagonal padded W_hh^T (Gp, 3*Gp).
    # Gate group g columns: [g*Gp, g*Gp+H) = fwd, [g*Gp+H, g*Gp+2H) = bwd, rest 0.
    gtab = jnp.zeros((V2p, G3), jnp.float32)
    whh_bd = jnp.zeros((Gp, G3), jnp.float32)
    for g in range(3):                                        # r, z, n
        gtab = gtab.at[:V, g * Gp:g * Gp + H].set(tf[:, g * H:(g + 1) * H])
        gtab = gtab.at[V:2 * V, g * Gp + H:g * Gp + 2 * H].set(tb[:, g * H:(g + 1) * H])
        whh_bd = whh_bd.at[:H, g * Gp:g * Gp + H].set(whf[g * H:(g + 1) * H].T)
        whh_bd = whh_bd.at[H:2 * H, g * Gp + H:g * Gp + 2 * H].set(whb[g * H:(g + 1) * H].T)

    bhn = jnp.zeros((1, Gp), jnp.float32)                     # n-gate b_hh only
    bhn = bhn.at[0, :H].set(params["bias_hh_f"].astype(jnp.float32)[2 * H:])
    bhn = bhn.at[0, H:2 * H].set(params["bias_hh_b"].astype(jnp.float32)[2 * H:])

    mm_dtype = jnp.bfloat16 if use_bf16_matmul else jnp.float32
    gtab = gtab.astype(mm_dtype)
    whh_bd = whh_bd.astype(mm_dtype)
    gi_dtype = mm_dtype            # bf16 gi scratch halves recurrence vld BW / v7x VMEM

    # --- fused char-id operand: rows [0,T) fwd time order, rows [T,2T) are the
    # time-reversed backward ids pre-offset by V (selecting the bwd gtab block).
    flat = char_ids.reshape(N, T).astype(jnp.int32).T          # (T, N)
    ids_all = jnp.concatenate([flat, flat[::-1, :] + V], axis=0)   # (2T, N)

    # --- tile_n selection: VMEM budget + >=2 grid steps for v7x megacore -----
    mm_b = 2 if use_bf16_matmul else 4
    gi_b = 2 if gi_dtype == jnp.bfloat16 else 4

    def tile_bytes(tn):
        return (T * tn * G3 * (gi_b + 4)          # gi scratch + f32 matmul result temp
                + T * tn * V2p * (4 + mm_b)       # lane-iota + one-hot operand
                + 2 * (2 * T * tn * 4 + tn * Gp * 4))   # double-buffered ids / out blocks

    if N <= 128:
        tile = _round_up(max(N, 8), 8)                       # single small tile
    else:
        tile = _round_up(min(int(tile_n), _round_up(N, 128)), 128)
        while tile > 128 and tile_bytes(tile) > vmem_budget_bytes:
            tile = _round_up(tile // 2, 128)
        if tile > 128 and _round_up(N, tile) == tile:        # would be a 1-step grid:
            tile = _round_up(tile // 2, 128)                 # feed both v7x TensorCores
    n_pad = _round_up(N, tile)
    if n_pad != N:
        ids_all = jnp.pad(ids_all, ((0, 0), (0, n_pad - N)))
    n_tiles = n_pad // tile

    weight_bytes = 2 * (V2p * G3 + Gp * G3) * mm_b + 2 * Gp * 4
    vmem_limit = int(min(max(2 * (tile_bytes(tile) + weight_bytes), 32 << 20), 48 << 20))

    out = pl.pallas_call(
        char_gru_kernel,
        out_shape=jax.ShapeDtypeStruct((n_pad, Gp), jnp.float32),
        grid_spec=pltpu.PrefetchScalarGridSpec(
            num_scalar_prefetch=0,
            grid=(n_tiles,),
            in_specs=[
                pl.BlockSpec((2 * T, tile), lambda i: (0, i)),   # fused char ids
                pl.BlockSpec((V2p, G3), lambda i: (0, 0)),       # fused gi table (resident)
                pl.BlockSpec((Gp, G3), lambda i: (0, 0)),        # block-diag W_hh^T (resident)
                pl.BlockSpec((1, Gp), lambda i: (0, 0)),         # n-gate b_hh (resident)
            ],
            out_specs=pl.BlockSpec((tile, Gp), lambda i: (i, 0)),
            scratch_shapes=[pltpu.VMEM((T, tile, G3), gi_dtype)],
        ),
        compiler_params=pltpu.CompilerParams(
            dimension_semantics=("parallel",),                   # megacore split on v7x
            vmem_limit_bytes=vmem_limit),
    )(ids_all, gtab, whh_bd, bhn)

    h = out[:N, :2 * H].reshape(batch, seq_len, 2 * H)
    # dropout: eval mode / p=0 -> identity (training-mode dropout not emitted).
    return h


# ------------------------- deterministic parameter init ----------------------

def xavier_uniform(key, shape):
    fan_out, fan_in = shape
    bound = float(np.sqrt(6.0 / (fan_in + fan_out)))
    return jax.random.uniform(key, shape, jnp.float32, -bound, bound)


def orthogonal(key, shape):
    a = jax.random.normal(key, shape, jnp.float32)
    q, r = jnp.linalg.qr(a)
    q = q * jnp.sign(jnp.diagonal(r))[None, :]
    return q[:shape[0], :shape[1]]


def init_params(key, vocab_size, emb_size, hidden_size):
    H, E = hidden_size, emb_size
    keys = jax.random.split(key, 6)
    return {
        # torch.nn.init.uniform_(char_emb.weight, -0.001, 0.001)
        "char_emb": jax.random.uniform(keys[0], (vocab_size, E), jnp.float32,
                                       -0.001, 0.001),
        # forward direction (PyTorch layout: (3H, E), (3H, H)); biases = 0
        "weight_ih_f": xavier_uniform(keys[1], (3 * H, E)),
        "weight_hh_f": orthogonal(keys[2], (3 * H, H)),
        "bias_ih_f": jnp.zeros((3 * H,), jnp.float32),
        "bias_hh_f": jnp.zeros((3 * H,), jnp.float32),
        # backward direction
        "weight_ih_b": xavier_uniform(keys[3], (3 * H, E)),
        "weight_hh_b": orthogonal(keys[4], (3 * H, H)),
        "bias_ih_b": jnp.zeros((3 * H,), jnp.float32),
        "bias_hh_b": jnp.zeros((3 * H,), jnp.float32),
    }


# ------------------------------ pure-JAX reference ---------------------------

def gru_final_ref(x, wih, whh, bih, bhh, H):
    # x: (N, T, E); PyTorch-layout weights (3H, E)/(3H, H). Returns final h (N, H).
    N = x.shape[0]

    def cell(h, x_t):
        gi = x_t @ wih.T + bih
        gh = h @ whh.T + bhh
        r = jax.nn.sigmoid(gi[:, :H] + gh[:, :H])
        z = jax.nn.sigmoid(gi[:, H:2 * H] + gh[:, H:2 * H])
        n = jnp.tanh(gi[:, 2 * H:] + r * gh[:, 2 * H:])
        return (1.0 - z) * n + z * h, None

    h0 = jnp.zeros((N, H), jnp.float32)
    h, _ = lax.scan(cell, h0, jnp.transpose(x, (1, 0, 2)))
    return h


def char_embedding_ref(char_ids, params, *, hidden_size):
    batch, seq_len, word_len = char_ids.shape
    H = hidden_size
    flat_ids = char_ids.reshape(-1, word_len)
    c = jnp.take(params["char_emb"], flat_ids, axis=0).astype(jnp.float32)
    h_f = gru_final_ref(c, params["weight_ih_f"], params["weight_hh_f"],
                        params["bias_ih_f"], params["bias_hh_f"], H)
    h_b = gru_final_ref(c[:, ::-1, :], params["weight_ih_b"], params["weight_hh_b"],
                        params["bias_ih_b"], params["bias_hh_b"], H)
    return jnp.concatenate([h_f, h_b], axis=-1).reshape(batch, seq_len, 2 * H)


# ----------------------------------- main ------------------------------------

if __name__ == "__main__":
    # config: char_vocab=32, char_embedding_size=16, hidden_size=32,
    #         char_rnn_bidirectional=True, char_rnn_num_layers=1, char_dropout=0.0
    VOCAB, E, H = 32, 16, 32
    BATCH, SEQ, WORD = 2, 4, 8

    key = jax.random.PRNGKey(0)
    k_par, k_ids = jax.random.split(key)
    params = init_params(k_par, VOCAB, E, H)
    char_ids = jax.random.randint(k_ids, (BATCH, SEQ, WORD), 0, VOCAB, jnp.int32)

    ref = jax.block_until_ready(char_embedding_ref(char_ids, params, hidden_size=H))

    # Exact path (f32 MXU operands): tight tolerance.
    out_f32 = jax.block_until_ready(
        char_embedding_forward(char_ids, params, hidden_size=H,
                               use_bf16_matmul=False))
    assert out_f32.shape == (BATCH, SEQ, 2 * H), out_f32.shape
    np.testing.assert_allclose(np.asarray(out_f32), np.asarray(ref),
                               rtol=2e-5, atol=2e-5)

    # Default fast path (bf16 MXU operands, f32 gate math): looser tolerance.
    out_bf16 = jax.block_until_ready(
        char_embedding_forward(char_ids, params, hidden_size=H))
    assert out_bf16.shape == (BATCH, SEQ, 2 * H), out_bf16.shape
    np.testing.assert_allclose(np.asarray(out_bf16), np.asarray(ref),
                               rtol=5e-2, atol=5e-4)

    print("KERNEL_OK")
</pallas_src>

<mosaic_0001>
module attributes {stable_mosaic.version = 11 : i64} {
  func.func @char_gru_kernel(%arg0: i32, %arg1: memref<16x8xi32, #tpu.memory_space<vmem>>, %arg2: memref<128x384xf32, #tpu.memory_space<vmem>>, %arg3: memref<128x384xf32, #tpu.memory_space<vmem>>, %arg4: memref<1x128xf32, #tpu.memory_space<vmem>>, %arg5: memref<8x128xf32, #tpu.memory_space<vmem>>, %arg6: memref<8x8x384xf32, #tpu.memory_space<vmem>>) attributes {dimension_semantics = [#tpu.dimension_semantics<parallel>], iteration_bounds = array<i64: 1>, scalar_prefetch = 0 : i64, scratch_operands = 1 : i64, tpu.core_type = #tpu.core_type<tc>, window_params = [{transform_indices = @transform_0, window_bounds = array<i64: 16, 8>}, {pipeline_mode = #tpu.pipeline_mode<synchronous>, transform_indices = @transform_1, window_bounds = array<i64: 128, 384>}, {pipeline_mode = #tpu.pipeline_mode<synchronous>, transform_indices = @transform_2, window_bounds = array<i64: 128, 384>}, {pipeline_mode = #tpu.pipeline_mode<synchronous>, transform_indices = @transform_3, window_bounds = array<i64: 1, 128>}, {transform_indices = @transform_4, window_bounds = array<i64: 8, 128>}]} {
    %c0 = arith.constant 0 : index
    %c0_0 = arith.constant 0 : index
    %0 = vector.load %arg1[%c0, %c0_0] : memref<16x8xi32, #tpu.memory_space<vmem>>, vector<16x8xi32>
    %1 = tpu.iota {dimensions = array<i32: 2>} : vector<8x8x128xi32>
    %2 = vector.extract_strided_slice %0 {offsets = [0, 0], sizes = [8, 8], strides = [1, 1]} : vector<16x8xi32> to vector<8x8xi32>
    %3 = vector.shape_cast %2 : vector<8x8xi32> to vector<8x8x1xi32>
    %4 = vector.broadcast %3 : vector<8x8x1xi32> to vector<8x8x128xi32>
    %5 = arith.cmpi eq, %1, %4 : vector<8x8x128xi32>
    %6 = vector.extract_strided_slice %0 {offsets = [8, 0], sizes = [8, 8], strides = [1, 1]} : vector<16x8xi32> to vector<8x8xi32>
    %7 = vector.shape_cast %6 : vector<8x8xi32> to vector<8x8x1xi32>
    %8 = vector.broadcast %7 : vector<8x8x1xi32> to vector<8x8x128xi32>
    %9 = arith.cmpi eq, %1, %8 : vector<8x8x128xi32>
    %10 = arith.ori %5, %9 : vector<8x8x128xi1>
    %11 = arith.extui %10 : vector<8x8x128xi1> to vector<8x8x128xi32>
    %12 = arith.sitofp %11 : vector<8x8x128xi32> to vector<8x8x128xf32>
    %13 = vector.shape_cast %12 : vector<8x8x128xf32> to vector<64x128xf32>
    %c0_1 = arith.constant 0 : index
    %c0_2 = arith.constant 0 : index
    %14 = vector.load %arg2[%c0_1, %c0_2] : memref<128x384xf32, #tpu.memory_space<vmem>>, vector<128x384xf32>
    %cst = arith.constant dense<0.000000e+00> : vector<64x384xf32>
    %15 = tpu.matmul %13, %14, %cst {dimension_numbers = #tpu.dot_dimension_numbers<[1], [0], [0], [1], [0, 0, 1, 1], [], []>} : vector<64x128xf32>, vector<128x384xf32>, vector<64x384xf32> -> vector<64x384xf32>
    %16 = vector.shape_cast %15 : vector<64x384xf32> to vector<8x8x384xf32>
    %c0_3 = arith.constant 0 : index
    %c0_4 = arith.constant 0 : index
    %c0_5 = arith.constant 0 : index
    %17 = vector.load %arg6[%c0_3, %c0_4, %c0_5] : memref<8x8x384xf32, #tpu.memory_space<vmem>>, vector<8x8x384xf32>
    tpu.vector_store %arg6[%c0_3, %c0_4, %c0_5], %16 {strides = array<i32>} : memref<8x8x384xf32, #tpu.memory_space<vmem>>, vector<8x8x384xf32>,
    %c0_6 = arith.constant 0 : index
    %c0_7 = arith.constant 0 : index
    %18 = vector.load %arg3[%c0_6, %c0_7] : memref<128x384xf32, #tpu.memory_space<vmem>>, vector<128x384xf32>
    %c0_8 = arith.constant 0 : index
    %c0_9 = arith.constant 0 : index
    %19 = vector.load %arg4[%c0_8, %c0_9] : memref<1x128xf32, #tpu.memory_space<vmem>>, vector<1x128xf32>
    %20 = vector.shape_cast %19 : vector<1x128xf32> to vector<1x128xf32>
    %21 = vector.broadcast %20 : vector<1x128xf32> to vector<8x128xf32>
    %cst_10 = arith.constant 0.000000e+00 : f32
    %22 = vector.broadcast %cst_10 : f32 to vector<8x128xf32>
    %c0_11 = arith.constant 0 : index
    %c0_12 = arith.constant 0 : index
    %c0_13 = arith.constant 0 : index
    %23 = vector.load %arg6[%c0_11, %c0_12, %c0_13] : memref<8x8x384xf32, #tpu.memory_space<vmem>>, vector<1x8x384xf32>
    %24 = vector.shape_cast %23 : vector<1x8x384xf32> to vector<8x384xf32>
    %cst_14 = arith.constant dense<0.000000e+00> : vector<8x384xf32>
    %25 = tpu.matmul %22, %18, %cst_14 {dimension_numbers = #tpu.dot_dimension_numbers<[1], [0], [0], [1], [0, 0, 1, 1], [], []>} : vector<8x128xf32>, vector<128x384xf32>, vector<8x384xf32> -> vector<8x384xf32>
    %26 = vector.extract_strided_slice %24 {offsets = [0, 0], sizes = [8, 128], strides = [1, 1]} : vector<8x384xf32> to vector<8x128xf32>
    %27 = vector.extract_strided_slice %25 {offsets = [0, 0], sizes = [8, 128], strides = [1, 1]} : vector<8x384xf32> to vector<8x128xf32>
    %28 = arith.addf %26, %27 : vector<8x128xf32>
    %29 = arith.negf %28 : vector<8x128xf32>
    %30 = math.exp %29 : vector<8x128xf32>
    %cst_15 = arith.constant 1.000000e+00 : f32
    %31 = vector.broadcast %cst_15 : f32 to vector<8x128xf32>
    %32 = arith.addf %31, %30 : vector<8x128xf32>
    %33 = arith.divf %31, %32 : vector<8x128xf32>
    %34 = vector.extract_strided_slice %24 {offsets = [0, 128], sizes = [8, 128], strides = [1, 1]} : vector<8x384xf32> to vector<8x128xf32>
    %35 = vector.extract_strided_slice %25 {offsets = [0, 128], sizes = [8, 128], strides = [1, 1]} : vector<8x384xf32> to vector<8x128xf32>
    %36 = arith.addf %34, %35 : vector<8x128xf32>
    %37 = arith.negf %36 : vector<8x128xf32>
    %38 = math.exp %37 : vector<8x128xf32>
    %cst_16 = arith.constant 1.000000e+00 : f32
    %39 = vector.broadcast %cst_16 : f32 to vector<8x128xf32>
    %40 = arith.addf %39, %38 : vector<8x128xf32>
    %41 = arith.divf %39, %40 : vector<8x128xf32>
    %42 = vector.extract_strided_slice %24 {offsets = [0, 256], sizes = [8, 128], strides = [1, 1]} : vector<8x384xf32> to vector<8x128xf32>
    %43 = vector.extract_strided_slice %25 {offsets = [0, 256], sizes = [8, 128], strides = [1, 1]} : vector<8x384xf32> to vector<8x128xf32>
    %44 = arith.addf %43, %21 : vector<8x128xf32>
    %45 = arith.mulf %33, %44 : vector<8x128xf32>
    %46 = arith.addf %42, %45 : vector<8x128xf32>
    %47 = math.tanh %46 : vector<8x128xf32>
    %48 = arith.subf %22, %47 : vector<8x128xf32>
    %49 = arith.mulf %41, %48 : vector<8x128xf32>
    %50 = arith.addf %47, %49 : vector<8x128xf32>
    %c1 = arith.constant 1 : index
    %c0_17 = arith.constant 0 : index
    %c0_18 = arith.constant 0 : index
    %51 = vector.load %arg6[%c1, %c0_17, %c0_18] : memref<8x8x384xf32, #tpu.memory_space<vmem>>, vector<1x8x384xf32>
    %52 = vector.shape_cast %51 : vector<1x8x384xf32> to vector<8x384xf32>
    %cst_19 = arith.constant dense<0.000000e+00> : vector<8x384xf32>
    %53 = tpu.matmul %50, %18, %cst_19 {dimension_numbers = #tpu.dot_dimension_numbers<[1], [0], [0], [1], [0, 0, 1, 1], [], []>} : vector<8x128xf32>, vector<128x384xf32>, vector<8x384xf32> -> vector<8x384xf32>
    %54 = vector.extract_strided_slice %52 {offsets = [0, 0], sizes = [8, 128], strides = [1, 1]} : vector<8x384xf32> to vector<8x128xf32>
    %55 = vector.extract_strided_slice %53 {offsets = [0, 0], sizes = [8, 128], strides = [1, 1]} : vector<8x384xf32> to vector<8x128xf32>
    %56 = arith.addf %54, %55 : vector<8x128xf32>
    %57 = arith.negf %56 : vector<8x128xf32>
    %58 = math.exp %57 : vector<8x128xf32>
    %cst_20 = arith.constant 1.000000e+00 : f32
    %59 = vector.broadcast %cst_20 : f32 to vector<8x128xf32>
    %60 = arith.addf %59, %58 : vector<8x128xf32>
    %61 = arith.divf %59, %60 : vector<8x128xf32>
    %62 = vector.extract_strided_slice %52 {offsets = [0, 128], sizes = [8, 128], strides = [1, 1]} : vector<8x384xf32> to vector<8x128xf32>
    %63 = vector.extract_strided_slice %53 {offsets = [0, 128], sizes = [8, 128], strides = [1, 1]} : vector<8x384xf32> to vector<8x128xf32>
    %64 = arith.addf %62, %63 : vector<8x128xf32>
    %65 = arith.negf %64 : vector<8x128xf32>
    %66 = math.exp %65 : vector<8x128xf32>
    %cst_21 = arith.constant 1.000000e+00 : f32
    %67 = vector.broadcast %cst_21 : f32 to vector<8x128xf32>
    %68 = arith.addf %67, %66 : vector<8x128xf32>
    %69 = arith.divf %67, %68 : vector<8x128xf32>
    %70 = vector.extract_strided_slice %52 {offsets = [0, 256], sizes = [8, 128], strides = [1, 1]} : vector<8x384xf32> to vector<8x128xf32>
    %71 = vector.extract_strided_slice %53 {offsets = [0, 256], sizes = [8, 128], strides = [1, 1]} : vector<8x384xf32> to vector<8x128xf32>
    %72 = arith.addf %71, %21 : vector<8x128xf32>
    %73 = arith.mulf %61, %72 : vector<8x128xf32>
    %74 = arith.addf %70, %73 : vector<8x128xf32>
    %75 = math.tanh %74 : vector<8x128xf32>
    %76 = arith.subf %50, %75 : vector<8x128xf32>
    %77 = arith.mulf %69, %76 : vector<8x128xf32>
    %78 = arith.addf %75, %77 : vector<8x128xf32>
    %c2 = arith.constant 2 : index
    %c0_22 = arith.constant 0 : index
    %c0_23 = arith.constant 0 : index
    %79 = vector.load %arg6[%c2, %c0_22, %c0_23] : memref<8x8x384xf32, #tpu.memory_space<vmem>>, vector<1x8x384xf32>
    %80 = vector.shape_cast %79 : vector<1x8x384xf32> to vector<8x384xf32>
    %cst_24 = arith.constant dense<0.000000e+00> : vector<8x384xf32>
    %81 = tpu.matmul %78, %18, %cst_24 {dimension_numbers = #tpu.dot_dimension_numbers<[1], [0], [0], [1], [0, 0, 1, 1], [], []>} : vector<8x128xf32>, vector<128x384xf32>, vector<8x384xf32> -> vector<8x384xf32>
    %82 = vector.extract_strided_slice %80 {offsets = [0, 0], sizes = [8, 128], strides = [1, 1]} : vector<8x384xf32> to vector<8x128xf32>
    %83 = vector.extract_strided_slice %81 {offsets = [0, 0], sizes = [8, 128], strides = [1, 1]} : vector<8x384xf32> to vector<8x128xf32>
    %84 = arith.addf %82, %83 : vector<8x128xf32>
    %85 = arith.negf %84 : vector<8x128xf32>
    %86 = math.exp %85 : vector<8x128xf32>
    %cst_25 = arith.constant 1.000000e+00 : f32
    %87 = vector.broadcast %cst_25 : f32 to vector<8x128xf32>
    %88 = arith.addf %87, %86 : vector<8x128xf32>
    %89 = arith.divf %87, %88 : vector<8x128xf32>
    %90 = vector.extract_strided_slice %80 {offsets = [0, 128], sizes = [8, 128], strides = [1, 1]} : vector<8x384xf32> to vector<8x128xf32>
    %91 = vector.extract_strided_slice %81 {offsets = [0, 128], sizes = [8, 128], strides = [1, 1]} : vector<8x384xf32> to vector<8x128xf32>
    %92 = arith.addf %90, %91 : vector<8x128xf32>
    %93 = arith.negf %92 : vector<8x128xf32>
    %94 = math.exp %93 : vector<8x128xf32>
    %cst_26 = arith.constant 1.000000e+00 : f32
    %95 = vector.broadcast %cst_26 : f32 to vector<8x128xf32>
    %96 = arith.addf %95, %94 : vector<8x128xf32>
    %97 = arith.divf %95, %96 : vector<8x128xf32>
    %98 = vector.extract_strided_slice %80 {offsets = [0, 256], sizes = [8, 128], strides = [1, 1]} : vector<8x384xf32> to vector<8x128xf32>
    %99 = vector.extract_strided_slice %81 {offsets = [0, 256], sizes = [8, 128], strides = [1, 1]} : vector<8x384xf32> to vector<8x128xf32>
    %100 = arith.addf %99, %21 : vector<8x128xf32>
    %101 = arith.mulf %89, %100 : vector<8x128xf32>
    %102 = arith.addf %98, %101 : vector<8x128xf32>
    %103 = math.tanh %102 : vector<8x128xf32>
    %104 = arith.subf %78, %103 : vector<8x128xf32>
    %105 = arith.mulf %97, %104 : vector<8x128xf32>
    %106 = arith.addf %103, %105 : vector<8x128xf32>
    %c3 = arith.constant 3 : index
    %c0_27 = arith.constant 0 : index
    %c0_28 = arith.constant 0 : index
    %107 = vector.load %arg6[%c3, %c0_27, %c0_28] : memref<8x8x384xf32, #tpu.memory_space<vmem>>, vector<1x8x384xf32>
    %108 = vector.shape_cast %107 : vector<1x8x384xf32> to vector<8x384xf32>
    %cst_29 = arith.constant dense<0.000000e+00> : vector<8x384xf32>
    %109 = tpu.matmul %106, %18, %cst_29 {dimension_numbers = #tpu.dot_dimension_numbers<[1], [0], [0], [1], [0, 0, 1, 1], [], []>} : vector<8x128xf32>, vector<128x384xf32>, vector<8x384xf32> -> vector<8x384xf32>
    %110 = vector.extract_strided_slice %108 {offsets = [0, 0], sizes = [8, 128], strides = [1, 1]} : vector<8x384xf32> to vector<8x128xf32>
    %111 = vector.extract_strided_slice %109 {offsets = [0, 0], sizes = [8, 128], strides = [1, 1]} : vector<8x384xf32> to vector<8x128xf32>
    %112 = arith.addf %110, %111 : vector<8x128xf32>
    %113 = arith.negf %112 : vector<8x128xf32>
    %114 = math.exp %113 : vector<8x128xf32>
    %cst_30 = arith.constant 1.000000e+00 : f32
    %115 = vector.broadcast %cst_30 : f32 to vector<8x128xf32>
    %116 = arith.addf %115, %114 : vector<8x128xf32>
    %117 = arith.divf %115, %116 : vector<8x128xf32>
    %118 = vector.extract_strided_slice %108 {offsets = [0, 128], sizes = [8, 128], strides = [1, 1]} : vector<8x384xf32> to vector<8x128xf32>
    %119 = vector.extract_strided_slice %109 {offsets = [0, 128], sizes = [8, 128], strides = [1, 1]} : vector<8x384xf32> to vector<8x128xf32>
    %120 = arith.addf %118, %119 : vector<8x128xf32>
    %121 = arith.negf %120 : vector<8x128xf32>
    %122 = math.exp %121 : vector<8x128xf32>
    %cst_31 = arith.constant 1.000000e+00 : f32
    %123 = vector.broadcast %cst_31 : f32 to vector<8x128xf32>
    %124 = arith.addf %123, %122 : vector<8x128xf32>
    %125 = arith.divf %123, %124 : vector<8x128xf32>
    %126 = vector.extract_strided_slice %108 {offsets = [0, 256], sizes = [8, 128], strides = [1, 1]} : vector<8x384xf32> to vector<8x128xf32>
    %127 = vector.extract_strided_slice %109 {offsets = [0, 256], sizes = [8, 128], strides = [1, 1]} : vector<8x384xf32> to vector<8x128xf32>
    %128 = arith.addf %127, %21 : vector<8x128xf32>
    %129 = arith.mulf %117, %128 : vector<8x128xf32>
    %130 = arith.addf %126, %129 : vector<8x128xf32>
    %131 = math.tanh %130 : vector<8x128xf32>
    %132 = arith.subf %106, %131 : vector<8x128xf32>
    %133 = arith.mulf %125, %132 : vector<8x128xf32>
    %134 = arith.addf %131, %133 : vector<8x128xf32>
    %c4 = arith.constant 4 : index
    %c0_32 = arith.constant 0 : index
    %c0_33 = arith.constant 0 : index
    %135 = vector.load %arg6[%c4, %c0_32, %c0_33] : memref<8x8x384xf32, #tpu.memory_space<vmem>>, vector<1x8x384xf32>
    %136 = vector.shape_cast %135 : vector<1x8x384xf32> to vector<8x384xf32>
    %cst_34 = arith.constant dense<0.000000e+00> : vector<8x384xf32>
    %137 = tpu.matmul %134, %18, %cst_34 {dimension_numbers = #tpu.dot_dimension_numbers<[1], [0], [0], [1], [0, 0, 1, 1], [], []>} : vector<8x128xf32>, vector<128x384xf32>, vector<8x384xf32> -> vector<8x384xf32>
    %138 = vector.extract_strided_slice %136 {offsets = [0, 0], sizes = [8, 128], strides = [1, 1]} : vector<8x384xf32> to vector<8x128xf32>
    %139 = vector.extract_strided_slice %137 {offsets = [0, 0], sizes = [8, 128], strides = [1, 1]} : vector<8x384xf32> to vector<8x128xf32>
    %140 = arith.addf %138, %139 : vector<8x128xf32>
    %141 = arith.negf %140 : vector<8x128xf32>
    %142 = math.exp %141 : vector<8x128xf32>
    %cst_35 = arith.constant 1.000000e+00 : f32
    %143 = vector.broadcast %cst_35 : f32 to vector<8x128xf32>
    %144 = arith.addf %143, %142 : vector<8x128xf32>
    %145 = arith.divf %143, %144 : vector<8x128xf32>
    %146 = vector.extract_strided_slice %136 {offsets = [0, 128], sizes = [8, 128], strides = [1, 1]} : vector<8x384xf32> to vector<8x128xf32>
    %147 = vector.extract_strided_slice %137 {offsets = [0, 128], sizes = [8, 128], strides = [1, 1]} : vector<8x384xf32> to vector<8x128xf32>
    %148 = arith.addf %146, %147 : vector<8x128xf32>
    %149 = arith.negf %148 : vector<8x128xf32>
    %150 = math.exp %149 : vector<8x128xf32>
    %cst_36 = arith.constant 1.000000e+00 : f32
    %151 = vector.broadcast %cst_36 : f32 to vector<8x128xf32>
    %152 = arith.addf %151, %150 : vector<8x128xf32>
    %153 = arith.divf %151, %152 : vector<8x128xf32>
    %154 = vector.extract_strided_slice %136 {offsets = [0, 256], sizes = [8, 128], strides = [1, 1]} : vector<8x384xf32> to vector<8x128xf32>
    %155 = vector.extract_strided_slice %137 {offsets = [0, 256], sizes = [8, 128], strides = [1, 1]} : vector<8x384xf32> to vector<8x128xf32>
    %156 = arith.addf %155, %21 : vector<8x128xf32>
    %157 = arith.mulf %145, %156 : vector<8x128xf32>
    %158 = arith.addf %154, %157 : vector<8x128xf32>
    %159 = math.tanh %158 : vector<8x128xf32>
    %160 = arith.subf %134, %159 : vector<8x128xf32>
    %161 = arith.mulf %153, %160 : vector<8x128xf32>
    %162 = arith.addf %159, %161 : vector<8x128xf32>
    %c5 = arith.constant 5 : index
    %c0_37 = arith.constant 0 : index
    %c0_38 = arith.constant 0 : index
    %163 = vector.load %arg6[%c5, %c0_37, %c0_38] : memref<8x8x384xf32, #tpu.memory_space<vmem>>, vector<1x8x384xf32>
    %164 = vector.shape_cast %163 : vector<1x8x384xf32> to vector<8x384xf32>
    %cst_39 = arith.constant dense<0.000000e+00> : vector<8x384xf32>
    %165 = tpu.matmul %162, %18, %cst_39 {dimension_numbers = #tpu.dot_dimension_numbers<[1], [0], [0], [1], [0, 0, 1, 1], [], []>} : vector<8x128xf32>, vector<128x384xf32>, vector<8x384xf32> -> vector<8x384xf32>
    %166 = vector.extract_strided_slice %164 {offsets = [0, 0], sizes = [8, 128], strides = [1, 1]} : vector<8x384xf32> to vector<8x128xf32>
    %167 = vector.extract_strided_slice %165 {offsets = [0, 0], sizes = [8, 128], strides = [1, 1]} : vector<8x384xf32> to vector<8x128xf32>
    %168 = arith.addf %166, %167 : vector<8x128xf32>
    %169 = arith.negf %168 : vector<8x128xf32>
    %170 = math.exp %169 : vector<8x128xf32>
    %cst_40 = arith.constant 1.000000e+00 : f32
    %171 = vector.broadcast %cst_40 : f32 to vector<8x128xf32>
    %172 = arith.addf %171, %170 : vector<8x128xf32>
    %173 = arith.divf %171, %172 : vector<8x128xf32>
    %174 = vector.extract_strided_slice %164 {offsets = [0, 128], sizes = [8, 128], strides = [1, 1]} : vector<8x384xf32> to vector<8x128xf32>
    %175 = vector.extract_strided_slice %165 {offsets = [0, 128], sizes = [8, 128], strides = [1, 1]} : vector<8x384xf32> to vector<8x128xf32>
    %176 = arith.addf %174, %175 : vector<8x128xf32>
    %177 = arith.negf %176 : vector<8x128xf32>
    %178 = math.exp %177 : vector<8x128xf32>
    %cst_41 = arith.constant 1.000000e+00 : f32
    %179 = vector.broadcast %cst_41 : f32 to vector<8x128xf32>
    %180 = arith.addf %179, %178 : vector<8x128xf32>
    %181 = arith.divf %179, %180 : vector<8x128xf32>
    %182 = vector.extract_strided_slice %164 {offsets = [0, 256], sizes = [8, 128], strides = [1, 1]} : vector<8x384xf32> to vector<8x128xf32>
    %183 = vector.extract_strided_slice %165 {offsets = [0, 256], sizes = [8, 128], strides = [1, 1]} : vector<8x384xf32> to vector<8x128xf32>
    %184 = arith.addf %183, %21 : vector<8x128xf32>
    %185 = arith.mulf %173, %184 : vector<8x128xf32>
    %186 = arith.addf %182, %185 : vector<8x128xf32>
    %187 = math.tanh %186 : vector<8x128xf32>
    %188 = arith.subf %162, %187 : vector<8x128xf32>
    %189 = arith.mulf %181, %188 : vector<8x128xf32>
    %190 = arith.addf %187, %189 : vector<8x128xf32>
    %c6 = arith.constant 6 : index
    %c0_42 = arith.constant 0 : index
    %c0_43 = arith.constant 0 : index
    %191 = vector.load %arg6[%c6, %c0_42, %c0_43] : memref<8x8x384xf32, #tpu.memory_space<vmem>>, vector<1x8x384xf32>
    %192 = vector.shape_cast %191 : vector<1x8x384xf32> to vector<8x384xf32>
    %cst_44 = arith.constant dense<0.000000e+00> : vector<8x384xf32>
    %193 = tpu.matmul %190, %18, %cst_44 {dimension_numbers = #tpu.dot_dimension_numbers<[1], [0], [0], [1], [0, 0, 1, 1], [], []>} : vector<8x128xf32>, vector<128x384xf32>, vector<8x384xf32> -> vector<8x384xf32>
    %194 = vector.extract_strided_slice %192 {offsets = [0, 0], sizes = [8, 128], strides = [1, 1]} : vector<8x384xf32> to vector<8x128xf32>
    %195 = vector.extract_strided_slice %193 {offsets = [0, 0], sizes = [8, 128], strides = [1, 1]} : vector<8x384xf32> to vector<8x128xf32>
    %196 = arith.addf %194, %195 : vector<8x128xf32>
    %197 = arith.negf %196 : vector<8x128xf32>
    %198 = math.exp %197 : vector<8x128xf32>
    %cst_45 = arith.constant 1.000000e+00 : f32
    %199 = vector.broadcast %cst_45 : f32 to vector<8x128xf32>
    %200 = arith.addf %199, %198 : vector<8x128xf32>
    %201 = arith.divf %199, %200 : vector<8x128xf32>
    %202 = vector.extract_strided_slice %192 {offsets = [0, 128], sizes = [8, 128], strides = [1, 1]} : vector<8x384xf32> to vector<8x128xf32>
    %203 = vector.extract_strided_slice %193 {offsets = [0, 128], sizes = [8, 128], strides = [1, 1]} : vector<8x384xf32> to vector<8x128xf32>
    %204 = arith.addf %202, %203 : vector<8x128xf32>
    %205 = arith.negf %204 : vector<8x128xf32>
    %206 = math.exp %205 : vector<8x128xf32>
    %cst_46 = arith.constant 1.000000e+00 : f32
    %207 = vector.broadcast %cst_46 : f32 to vector<8x128xf32>
    %208 = arith.addf %207, %206 : vector<8x128xf32>
    %209 = arith.divf %207, %208 : vector<8x128xf32>
    %210 = vector.extract_strided_slice %192 {offsets = [0, 256], sizes = [8, 128], strides = [1, 1]} : vector<8x384xf32> to vector<8x128xf32>
    %211 = vector.extract_strided_slice %193 {offsets = [0, 256], sizes = [8, 128], strides = [1, 1]} : vector<8x384xf32> to vector<8x128xf32>
    %212 = arith.addf %211, %21 : vector<8x128xf32>
    %213 = arith.mulf %201, %212 : vector<8x128xf32>
    %214 = arith.addf %210, %213 : vector<8x128xf32>
    %215 = math.tanh %214 : vector<8x128xf32>
    %216 = arith.subf %190, %215 : vector<8x128xf32>
    %217 = arith.mulf %209, %216 : vector<8x128xf32>
    %218 = arith.addf %215, %217 : vector<8x128xf32>
    %c7 = arith.constant 7 : index
    %c0_47 = arith.constant 0 : index
    %c0_48 = arith.constant 0 : index
    %219 = vector.load %arg6[%c7, %c0_47, %c0_48] : memref<8x8x384xf32, #tpu.memory_space<vmem>>, vector<1x8x384xf32>
    %220 = vector.shape_cast %219 : vector<1x8x384xf32> to vector<8x384xf32>
    %cst_49 = arith.constant dense<0.000000e+00> : vector<8x384xf32>
    %221 = tpu.matmul %218, %18, %cst_49 {dimension_numbers = #tpu.dot_dimension_numbers<[1], [0], [0], [1], [0, 0, 1, 1], [], []>} : vector<8x128xf32>, vector<128x384xf32>, vector<8x384xf32> -> vector<8x384xf32>
    %222 = vector.extract_strided_slice %220 {offsets = [0, 0], sizes = [8, 128], strides = [1, 1]} : vector<8x384xf32> to vector<8x128xf32>
    %223 = vector.extract_strided_slice %221 {offsets = [0, 0], sizes = [8, 128], strides = [1, 1]} : vector<8x384xf32> to vector<8x128xf32>
    %224 = arith.addf %222, %223 : vector<8x128xf32>
    %225 = arith.negf %224 : vector<8x128xf32>
    %226 = math.exp %225 : vector<8x128xf32>
    %cst_50 = arith.constant 1.000000e+00 : f32
    %227 = vector.broadcast %cst_50 : f32 to vector<8x128xf32>
    %228 = arith.addf %227, %226 : vector<8x128xf32>
    %229 = arith.divf %227, %228 : vector<8x128xf32>
    %230 = vector.extract_strided_slice %220 {offsets = [0, 128], sizes = [8, 128], strides = [1, 1]} : vector<8x384xf32> to vector<8x128xf32>
    %231 = vector.extract_strided_slice %221 {offsets = [0, 128], sizes = [8, 128], strides = [1, 1]} : vector<8x384xf32> to vector<8x128xf32>
    %232 = arith.addf %230, %231 : vector<8x128xf32>
    %233 = arith.negf %232 : vector<8x128xf32>
    %234 = math.exp %233 : vector<8x128xf32>
    %cst_51 = arith.constant 1.000000e+00 : f32
    %235 = vector.broadcast %cst_51 : f32 to vector<8x128xf32>
    %236 = arith.addf %235, %234 : vector<8x128xf32>
    %237 = arith.divf %235, %236 : vector<8x128xf32>
    %238 = vector.extract_strided_slice %220 {offsets = [0, 256], sizes = [8, 128], strides = [1, 1]} : vector<8x384xf32> to vector<8x128xf32>
    %239 = vector.extract_strided_slice %221 {offsets = [0, 256], sizes = [8, 128], strides = [1, 1]} : vector<8x384xf32> to vector<8x128xf32>
    %240 = arith.addf %239, %21 : vector<8x128xf32>
    %241 = arith.mulf %229, %240 : vector<8x128xf32>
    %242 = arith.addf %238, %241 : vector<8x128xf32>
    %243 = math.tanh %242 : vector<8x128xf32>
    %244 = arith.subf %218, %243 : vector<8x128xf32>
    %245 = arith.mulf %237, %244 : vector<8x128xf32>
    %246 = arith.addf %243, %245 : vector<8x128xf32>
    %c0_52 = arith.constant 0 : index
    %c0_53 = arith.constant 0 : index
    %247 = vector.load %arg5[%c0_52, %c0_53] : memref<8x128xf32, #tpu.memory_space<vmem>>, vector<8x128xf32>
    tpu.vector_store %arg5[%c0_52, %c0_53], %246 {strides = array<i32>} : memref<8x128xf32, #tpu.memory_space<vmem>>, vector<8x128xf32>,
    return
  }
  func.func @transform_0(%arg0: i32) -> (i32, i32) {
    %c0_i32 = arith.constant 0 : i32
    %c0_i32_0 = arith.constant 0 : i32
    return %c0_i32, %arg0 : i32, i32
  }
  func.func @transform_1(%arg0: i32) -> (i32, i32) {
    %c0_i32 = arith.constant 0 : i32
    %c0_i32_0 = arith.constant 0 : i32
    %c0_i32_1 = arith.constant 0 : i32
    return %c0_i32, %c0_i32_0 : i32, i32
  }
  func.func @transform_2(%arg0: i32) -> (i32, i32) {
    %c0_i32 = arith.constant 0 : i32
    %c0_i32_0 = arith.constant 0 : i32
    %c0_i32_1 = arith.constant 0 : i32
    return %c0_i32, %c0_i32_0 : i32, i32
  }
  func.func @transform_3(%arg0: i32) -> (i32, i32) {
    %c0_i32 = arith.constant 0 : i32
    %c0_i32_0 = arith.constant 0 : i32
    %c0_i32_1 = arith.constant 0 : i32
    return %c0_i32, %c0_i32_0 : i32, i32
  }
  func.func @transform_4(%arg0: i32) -> (i32, i32) {
    %c0_i32 = arith.constant 0 : i32
    %c0_i32_0 = arith.constant 0 : i32
    return %arg0, %c0_i32 : i32, i32
  }
}

</mosaic_0001>

<llo_original>
// kernel: tpu_custom_call.1
$region0: #{tpu_custom_call.1}
  #allocation0 [shape = 'u32[]', space=smem, size = 0x4, offset = 0x4, fixed_abs, tag = 'smem constant byte address 0x4 - core index']
  #allocation1 [shape = 'u32[144,128]{1,0:T(1,128)}', space=vmem, size = 0x12000, scoped, tag = 'internal scratch']
  #allocation2 [shape = 'f32[8,8,384]{2,1,0:T(8,128)}', space=vmem, size = 0x18000, scoped, tag = 'scratch operand']
  %s0 = inlined_call_operand.vmem [shape: s32[16,8], index: 0, kind: input, shape index: {}]
  %s1 = inlined_call_operand.hbm [shape: f32[128,384], index: 1, kind: input, shape index: {}]
  %s2 = inlined_call_operand.hbm [shape: f32[128,384], index: 2, kind: input, shape index: {}]
  %s3 = inlined_call_operand.vmem [shape: f32[1,128], index: 3, kind: input, shape index: {}]
  %s4 = inlined_call_operand.hbm [shape: f32[8,128], index: 4, kind: output, shape index: {}]
  %s5 = sld [smem:[#allocation0]]
  $region34: #{tpu_custom_call.1} parent=0
    _
  %s7 = ssub.s32 1, %s5
  %s8 = scalar_select 0, %s7, %s5
  $region1: #{tpu_custom_call.1} parent=0
    #allocation3 [shape = 'u8[196608]{0}', space=vmem, size = 0x30000, scoped, tag = 'input window, operand 1, single buffered']
    #allocation4 [shape = 's32[1]{0}', space=sflag, size = 0x4, scoped, tag = 'scoped memory for tpu_custom_call.1']
    #allocation5 [shape = 's32[1]{0}', space=sflag, size = 0x4, scoped, tag = 'scoped memory for tpu_custom_call.1']
    #allocation6 [shape = 'u8[196608]{0}', space=vmem, size = 0x30000, scoped, tag = 'input window, operand 2, single buffered']
    #allocation7 [shape = 's32[1]{0}', space=sflag, size = 0x4, scoped, tag = 'scoped memory for tpu_custom_call.1']
    #allocation8 [shape = 'u8[4096]{0}', space=vmem, size = 0x1000, scoped, tag = 'output window, operand 0, single buffered']
    %9 = vsyncpa [#allocation4], 0
    %10 = vsyncpa [#allocation7], 0
    %11 = vsyncpa [#allocation5], 0
    // Predicated region
    $region2: #{tpu_custom_call.1} parent=1 // pred_check
      _
    $region3: #{tpu_custom_call.1} parent=1 // pred_check_branch
      %13 = sbr.rel (0) target = $region5
    $region4: #{tpu_custom_call.1} parent=1 // pred_region
      _
    $region5: #{tpu_custom_call.1} parent=1 // pred_fallthru
      _
    // Predicated region
    $region6: #{tpu_custom_call.1} parent=1 // pred_check
      _
    $region7: #{tpu_custom_call.1} parent=1 // pred_check_branch
      %15 = sbr.rel (0) target = $region9
    $region8: #{tpu_custom_call.1} parent=1 // pred_region
      %s17 = ssub.s32 6144, 6144
      %18 = vsyncadd [#allocation4], %s17
      %s19 = sshll.u32 [#allocation3], 4
      %s20 = int_to_ptr.vmem [resolvable:$true] %s19
      %25 = dma.hbm_to_vmem [thread:$0]  %s1, 6144, %s20, [#allocation4], 384, 384, 24
    $region9: #{tpu_custom_call.1} parent=1 // pred_fallthru
      _
    // Predicated region
    $region10: #{tpu_custom_call.1} parent=1 // pred_check
      _
    $region11: #{tpu_custom_call.1} parent=1 // pred_check_branch
      %27 = sbr.rel (0) target = $region13
    $region12: #{tpu_custom_call.1} parent=1 // pred_region
      %s29 = ssub.s32 6144, 6144
      %30 = vsyncadd [#allocation7], %s29
      %s31 = sshll.u32 [#allocation6], 4
      %s32 = int_to_ptr.vmem [resolvable:$true] %s31
      %37 = dma.hbm_to_vmem [thread:$0]  %s2, 6144, %s32, [#allocation7], 384, 384, 24
    $region13: #{tpu_custom_call.1} parent=1 // pred_fallthru
      _
    // Predicated region
    $region14: #{tpu_custom_call.1} parent=1 // pred_check
      _
    $region15: #{tpu_custom_call.1} parent=1 // pred_check_branch
      %39 = sbr.rel (0) target = $region17
    $region16: #{tpu_custom_call.1} parent=1 // pred_region
      _
    $region17: #{tpu_custom_call.1} parent=1 // pred_fallthru
      _
    // Predicated region
    $region18: #{tpu_custom_call.1} parent=1 // pred_check
      _
    $region19: #{tpu_custom_call.1} parent=1 // pred_check_branch
      %41 = sbr.rel (0) target = $region21
    $region20: #{tpu_custom_call.1} parent=1 // pred_region
      %42 = dma.done [#allocation4], 6144
    $region21: #{tpu_custom_call.1} parent=1 // pred_fallthru
      _
    // Predicated region
    $region22: #{tpu_custom_call.1} parent=1 // pred_check
      _
    $region23: #{tpu_custom_call.1} parent=1 // pred_check_branch
      %44 = sbr.rel (0) target = $region25
    $region24: #{tpu_custom_call.1} parent=1 // pred_region
      %45 = dma.done [#allocation7], 6144
    $region25: #{tpu_custom_call.1} parent=1 // pred_fallthru
      _
    %v46 = vld [vmem:[%s0] sm:$0xff]
    %v47 = vld [vmem:[%s0 + $0x8] sm:$0xff]
    %v48 = vlaneseq
    %v49 = vand.u32 %v48, 127
    %v50 = vlaneseq
    %v51 = vshrl.u32 %v50, 7
    %v52 = vsub.s32 0, %v51
    %v53 = vrot.slane %v46, %v52
    %55 = vbcast.lane.b32.xlu0 %v53, 256
    %v56 = vpop.permute.xlu0 %55
    %v57 = vlaneseq
    %v58 = vshrl.u32 %v57, 7
    %v59 = vsub.s32 1, %v58
    %v60 = vrot.slane %v46, %v59
    %62 = vbcast.lane.b32.xlu0 %v60, 256
    %v63 = vpop.permute.xlu0 %62
    %v64 = vlaneseq
    %v65 = vshrl.u32 %v64, 7
    %v66 = vsub.s32 2, %v65
    %v67 = vrot.slane %v46, %v66
    %69 = vbcast.lane.b32.xlu0 %v67, 256
    %v70 = vpop.permute.xlu0 %69
    %v71 = vlaneseq
    %v72 = vshrl.u32 %v71, 7
    %v73 = vsub.s32 3, %v72
    %v74 = vrot.slane %v46, %v73
    %76 = vbcast.lane.b32.xlu0 %v74, 256
    %v77 = vpop.permute.xlu0 %76
    %v78 = vlaneseq
    %v79 = vshrl.u32 %v78, 7
    %v80 = vsub.s32 4, %v79
    %v81 = vrot.slane %v46, %v80
    %83 = vbcast.lane.b32.xlu0 %v81, 256
    %v84 = vpop.permute.xlu0 %83
    %v85 = vlaneseq
    %v86 = vshrl.u32 %v85, 7
    %v87 = vsub.s32 5, %v86
    %v88 = vrot.slane %v46, %v87
    %90 = vbcast.lane.b32.xlu0 %v88, 256
    %v91 = vpop.permute.xlu0 %90
    %v92 = vlaneseq
    %v93 = vshrl.u32 %v92, 7
    %v94 = vsub.s32 6, %v93
    %v95 = vrot.slane %v46, %v94
    %97 = vbcast.lane.b32.xlu0 %v95, 256
    %v98 = vpop.permute.xlu0 %97
    %v99 = vlaneseq
    %v100 = vshrl.u32 %v99, 7
    %v101 = vsub.s32 7, %v100
    %v102 = vrot.slane %v46, %v101
    %104 = vbcast.lane.b32.xlu0 %v102, 256
    %v105 = vpop.permute.xlu0 %104
    %vm106 = vcmp.eq.s32.totalorder %v49, %v56
    %vm107 = vcmp.eq.s32.totalorder %v49, %v63
    %vm108 = vcmp.eq.s32.totalorder %v49, %v70
    %vm109 = vcmp.eq.s32.totalorder %v49, %v77
    %vm110 = vcmp.eq.s32.totalorder %v49, %v84
    %vm111 = vcmp.eq.s32.totalorder %v49, %v91
    %vm112 = vcmp.eq.s32.totalorder %v49, %v98
    %vm113 = vcmp.eq.s32.totalorder %v49, %v105
    %v114 = vlaneseq
    %v115 = vshrl.u32 %v114, 7
    %v116 = vsub.s32 0, %v115
    %v117 = vrot.slane %v47, %v116
    %119 = vbcast.lane.b32.xlu0 %v117, 256
    %v120 = vpop.permute.xlu0 %119
    %v121 = vlaneseq
    %v122 = vshrl.u32 %v121, 7
    %v123 = vsub.s32 1, %v122
    %v124 = vrot.slane %v47, %v123
    %126 = vbcast.lane.b32.xlu0 %v124, 256
    %v127 = vpop.permute.xlu0 %126
    %v128 = vlaneseq
    %v129 = vshrl.u32 %v128, 7
    %v130 = vsub.s32 2, %v129
    %v131 = vrot.slane %v47, %v130
    %133 = vbcast.lane.b32.xlu0 %v131, 256
    %v134 = vpop.permute.xlu0 %133
    %v135 = vlaneseq
    %v136 = vshrl.u32 %v135, 7
    %v137 = vsub.s32 3, %v136
    %v138 = vrot.slane %v47, %v137
    %140 = vbcast.lane.b32.xlu0 %v138, 256
    %v141 = vpop.permute.xlu0 %140
    %v142 = vlaneseq
    %v143 = vshrl.u32 %v142, 7
    %v144 = vsub.s32 4, %v143
    %v145 = vrot.slane %v47, %v144
    %147 = vbcast.lane.b32.xlu0 %v145, 256
    %v148 = vpop.permute.xlu0 %147
    %v149 = vlaneseq
    %v150 = vshrl.u32 %v149, 7
    %v151 = vsub.s32 5, %v150
    %v152 = vrot.slane %v47, %v151
    %154 = vbcast.lane.b32.xlu0 %v152, 256
    %v155 = vpop.permute.xlu0 %154
    %v156 = vlaneseq
    %v157 = vshrl.u32 %v156, 7
    %v158 = vsub.s32 6, %v157
    %v159 = vrot.slane %v47, %v158
    %161 = vbcast.lane.b32.xlu0 %v159, 256
    %v162 = vpop.permute.xlu0 %161
    %v163 = vlaneseq
    %v164 = vshrl.u32 %v163, 7
    %v165 = vsub.s32 7, %v164
    %v166 = vrot.slane %v47, %v165
    %168 = vbcast.lane.b32.xlu0 %v166, 256
    %v169 = vpop.permute.xlu0 %168
    %vm170 = vcmp.eq.s32.totalorder %v49, %v120
    %vm171 = vcmp.eq.s32.totalorder %v49, %v127
    %vm172 = vcmp.eq.s32.totalorder %v49, %v134
    %vm173 = vcmp.eq.s32.totalorder %v49, %v141
    %vm174 = vcmp.eq.s32.totalorder %v49, %v148
    %vm175 = vcmp.eq.s32.totalorder %v49, %v155
    %vm176 = vcmp.eq.s32.totalorder %v49, %v162
    %vm177 = vcmp.eq.s32.totalorder %v49, %v169
    %vm178 = vmor %vm106, %vm170
    %vm179 = vmor %vm107, %vm171
    %vm180 = vmor %vm108, %vm172
    %vm181 = vmor %vm109, %vm173
    %vm182 = vmor %vm110, %vm174
    %vm183 = vmor %vm111, %vm175
    %vm184 = vmor %vm112, %vm176
    %vm185 = vmor %vm113, %vm177
    %v186 = vsel %vm178, 1, 0
    %v187 = vsel %vm179, 1, 0
    %v188 = vsel %vm180, 1, 0
    %v189 = vsel %vm181, 1, 0
    %v190 = vsel %vm182, 1, 0
    %v191 = vsel %vm183, 1, 0
    %v192 = vsel %vm184, 1, 0
    %v193 = vsel %vm185, 1, 0
    %v194 = vcvt.s32.f32 %v186
    %v195 = vcvt.s32.f32 %v187
    %v196 = vcvt.s32.f32 %v188
    %v197 = vcvt.s32.f32 %v189
    %v198 = vcvt.s32.f32 %v190
    %v199 = vcvt.s32.f32 %v191
    %v200 = vcvt.s32.f32 %v192
    %v201 = vcvt.s32.f32 %v193
    %v202 = vld [vmem:[#allocation3] sm:$0xff]
    %v203 = vld [vmem:[#allocation3 + $0x8] sm:$0xff]
    %v204 = vld [vmem:[#allocation3 + $0x10] sm:$0xff]
    %v205 = vld [vmem:[#allocation3 + $0x18] sm:$0xff]
    %v206 = vld [vmem:[#allocation3 + $0x20] sm:$0xff]
    %v207 = vld [vmem:[#allocation3 + $0x28] sm:$0xff]
    %v208 = vld [vmem:[#allocation3 + $0x30] sm:$0xff]
    %v209 = vld [vmem:[#allocation3 + $0x38] sm:$0xff]
    %v210 = vld [vmem:[#allocation3 + $0x40] sm:$0xff]
    %v211 = vld [vmem:[#allocation3 + $0x48] sm:$0xff]
    %v212 = vld [vmem:[#allocation3 + $0x50] sm:$0xff]
    %v213 = vld [vmem:[#allocation3 + $0x58] sm:$0xff]
    %v214 = vld [vmem:[#allocation3 + $0x60] sm:$0xff]
    %v215 = vld [vmem:[#allocation3 + $0x68] sm:$0xff]
    %v216 = vld [vmem:[#allocation3 + $0x70] sm:$0xff]
    %v217 = vld [vmem:[#allocation3 + $0x78] sm:$0xff]
    %v218 = vld [vmem:[#allocation3 + $0x80] sm:$0xff]
    %v219 = vld [vmem:[#allocation3 + $0x88] sm:$0xff]
    %v220 = vld [vmem:[#allocation3 + $0x90] sm:$0xff]
    %v221 = vld [vmem:[#allocation3 + $0x98] sm:$0xff]
    %v222 = vld [vmem:[#allocation3 + $0xa0] sm:$0xff]
    %v223 = vld [vmem:[#allocation3 + $0xa8] sm:$0xff]
    %v224 = vld [vmem:[#allocation3 + $0xb0] sm:$0xff]
    %v225 = vld [vmem:[#allocation3 + $0xb8] sm:$0xff]
    %v226 = vld [vmem:[#allocation3 + $0xc0] sm:$0xff]
    %v227 = vld [vmem:[#allocation3 + $0xc8] sm:$0xff]
    %v228 = vld [vmem:[#allocation3 + $0xd0] sm:$0xff]
    %v229 = vld [vmem:[#allocation3 + $0xd8] sm:$0xff]
    %v230 = vld [vmem:[#allocation3 + $0xe0] sm:$0xff]
    %v231 = vld [vmem:[#allocation3 + $0xe8] sm:$0xff]
    %v232 = vld [vmem:[#allocation3 + $0xf0] sm:$0xff]
    %v233 = vld [vmem:[#allocation3 + $0xf8] sm:$0xff]
    %v234 = vld [vmem:[#allocation3 + $0x100] sm:$0xff]
    %v235 = vld [vmem:[#allocation3 + $0x108] sm:$0xff]
    %v236 = vld [vmem:[#allocation3 + $0x110] sm:$0xff]
    %v237 = vld [vmem:[#allocation3 + $0x118] sm:$0xff]
    %v238 = vld [vmem:[#allocation3 + $0x120] sm:$0xff]
    %v239 = vld [vmem:[#allocation3 + $0x128] sm:$0xff]
    %v240 = vld [vmem:[#allocation3 + $0x130] sm:$0xff]
    %v241 = vld [vmem:[#allocation3 + $0x138] sm:$0xff]
    %v242 = vld [vmem:[#allocation3 + $0x140] sm:$0xff]
    %v243 = vld [vmem:[#allocation3 + $0x148] sm:$0xff]
    %v244 = vld [vmem:[#allocation3 + $0x150] sm:$0xff]
    %v245 = vld [vmem:[#allocation3 + $0x158] sm:$0xff]
    %v246 = vld [vmem:[#allocation3 + $0x160] sm:$0xff]
    %v247 = vld [vmem:[#allocation3 + $0x168] sm:$0xff]
    %v248 = vld [vmem:[#allocation3 + $0x170] sm:$0xff]
    %v249 = vld [vmem:[#allocation3 + $0x178] sm:$0xff]
    %250 = vmatprep.subr.mxu0 %v248
    %251 = vmatpush1.msra.mxu0 %v247
    %252 = vmatprep.subr.mxu0 %v245
    %253 = vmatpush1.msra.mxu0 %v244
    %254 = vmatprep.subr.mxu0 %v242
    %255 = vmatpush1.msra.mxu0 %v241
    %256 = vmatprep.subr.mxu0 %v239
    %257 = vmatpush1.msra.mxu0 %v238
    %258 = vmatprep.subr.mxu0 %v236
    %259 = vmatpush1.msra.mxu0 %v235
    %260 = vmatprep.subr.mxu0 %v233
    %261 = vmatpush1.msra.mxu0 %v232
    %262 = vmatprep.subr.mxu0 %v230
    %263 = vmatpush1.msra.mxu0 %v229
    %264 = vmatprep.subr.mxu0 %v227
    %265 = vmatpush1.msra.mxu0 %v226
    %266 = vmatprep.subr.mxu0 %v224
    %267 = vmatpush1.msra.mxu0 %v223
    %268 = vmatprep.subr.mxu0 %v221
    %269 = vmatpush1.msra.mxu0 %v220
    %270 = vmatprep.subr.mxu0 %v218
    %271 = vmatpush1.msra.mxu0 %v217
    %272 = vmatprep.subr.mxu0 %v215
    %273 = vmatpush1.msra.mxu0 %v214
    %274 = vmatprep.subr.mxu0 %v212
    %275 = vmatpush1.msra.mxu0 %v211
    %276 = vmatprep.subr.mxu0 %v209
    %277 = vmatpush1.msra.mxu0 %v208
    %278 = vmatprep.subr.mxu0 %v206
    %279 = vmatpush1.msra.mxu0 %v205
    %280 = vmatprep.subr.mxu0 %v203
    %281 = vmatpush1.msra.mxu0 %v202
    %282 = vmatprep.subr.mxu0 0.0
    %283 = vmatpush2.msra.mxu0 0.0
    %284 = vmatprep.subr.mxu0 0.0
    %285 = vmatpush2.msra.mxu0 0.0
    %286 = vmatprep.subr.mxu0 0.0
    %287 = vmatpush2.msra.mxu0 0.0
    %288 = vmatprep.subr.mxu0 0.0
    %289 = vmatpush2.msra.mxu0 0.0
    %290 = vmatprep.subr.mxu0 0.0
    %291 = vmatpush2.msra.mxu0 0.0
    %292 = vmatprep.subr.mxu0 0.0
    %293 = vmatpush2.msra.mxu0 0.0
    %294 = vmatprep.subr.mxu0 0.0
    %295 = vmatpush2.msra.mxu0 0.0
    %296 = vmatprep.subr.mxu0 0.0
    %297 = vmatpush2.msra.mxu0 0.0
    %298 = vmatprep.subr.mxu0 0.0
    %299 = vmatpush2.msra.mxu0 0.0
    %300 = vmatprep.subr.mxu0 0.0
    %301 = vmatpush2.msra.mxu0 0.0
    %302 = vmatprep.subr.mxu0 0.0
    %303 = vmatpush2.msra.mxu0 0.0
    %304 = vmatprep.subr.mxu0 0.0
    %305 = vmatpush2.msra.mxu0 0.0
    %306 = vmatprep.subr.mxu0 0.0
    %307 = vmatpush2.msra.mxu0 0.0
    %308 = vmatprep.subr.mxu0 0.0
    %309 = vmatpush2.msra.mxu0 0.0
    %310 = vmatprep.subr.mxu0 0.0
    %311 = vmatpush2.msra.mxu0 0.0
    %312 = vmatprep.subr.mxu0 0.0
    %313 = vmatpush2.msra.mxu0 0.0
    %314 = vmatprep.mubr.f32.mxu0 0.0
    %315 = vmatmul.mubr.f32.gmra.mxu0 %v194
    %v316 = vpop.f32.mrf.mxu0
    %v317 = vadd.f32 0.0, %v316
    %v318 = vpop.f32.mrf.mxu0
    %v319 = vadd.f32 0.0, %v318
    %320 = vmatprep.mubr.f32.mxu0 0.0
    %321 = vmatmul.mubr.f32.gmra.mxu0 %v195
    %v322 = vpop.f32.mrf.mxu0
    %v323 = vadd.f32 0.0, %v322
    %v324 = vpop.f32.mrf.mxu0
    %v325 = vadd.f32 0.0, %v324
    %326 = vmatprep.mubr.f32.mxu0 0.0
    %327 = vmatmul.mubr.f32.gmra.mxu0 %v196
    %v328 = vpop.f32.mrf.mxu0
    %v329 = vadd.f32 0.0, %v328
    %v330 = vpop.f32.mrf.mxu0
    %v331 = vadd.f32 0.0, %v330
    %332 = vmatprep.mubr.f32.mxu0 0.0
    %333 = vmatmul.mubr.f32.gmra.mxu0 %v197
    %v334 = vpop.f32.mrf.mxu0
    %v335 = vadd.f32 0.0, %v334
    %v336 = vpop.f32.mrf.mxu0
    %v337 = vadd.f32 0.0, %v336
    %338 = vmatprep.mubr.f32.mxu0 0.0
    %339 = vmatmul.mubr.f32.gmra.mxu0 %v198
    %v340 = vpop.f32.mrf.mxu0
    %v341 = vadd.f32 0.0, %v340
    %v342 = vpop.f32.mrf.mxu0
    %v343 = vadd.f32 0.0, %v342
    %344 = vmatprep.mubr.f32.mxu0 0.0
    %345 = vmatmul.mubr.f32.gmra.mxu0 %v199
    %v346 = vpop.f32.mrf.mxu0
    %v347 = vadd.f32 0.0, %v346
    %v348 = vpop.f32.mrf.mxu0
    %v349 = vadd.f32 0.0, %v348
    %350 = vmatprep.mubr.f32.mxu0 0.0
    %351 = vmatmul.mubr.f32.gmra.mxu0 %v200
    %v352 = vpop.f32.mrf.mxu0
    %v353 = vadd.f32 0.0, %v352
    %v354 = vpop.f32.mrf.mxu0
    %v355 = vadd.f32 0.0, %v354
    %356 = vmatprep.mubr.f32.mxu0 0.0
    %357 = vmatmul.mubr.f32.gmra.mxu0 %v201
    %v358 = vpop.f32.mrf.mxu0
    %v359 = vadd.f32 0.0, %v358
    %v360 = vpop.f32.mrf.mxu0
    %v361 = vadd.f32 0.0, %v360
    %362 = vdwg.mxu0
    %363 = vmatprep.subr.mxu0 0.0
    %364 = vmatpush1.msra.mxu0 %v249
    %365 = vmatprep.subr.mxu0 0.0
    %366 = vmatpush1.msra.mxu0 %v246
    %367 = vmatprep.subr.mxu0 0.0
    %368 = vmatpush1.msra.mxu0 %v243
    %369 = vmatprep.subr.mxu0 0.0
    %370 = vmatpush1.msra.mxu0 %v240
    %371 = vmatprep.subr.mxu0 0.0
    %372 = vmatpush1.msra.mxu0 %v237
    %373 = vmatprep.subr.mxu0 0.0
    %374 = vmatpush1.msra.mxu0 %v234
    %375 = vmatprep.subr.mxu0 0.0
    %376 = vmatpush1.msra.mxu0 %v231
    %377 = vmatprep.subr.mxu0 0.0
    %378 = vmatpush1.msra.mxu0 %v228
    %379 = vmatprep.subr.mxu0 0.0
    %380 = vmatpush1.msra.mxu0 %v225
    %381 = vmatprep.subr.mxu0 0.0
    %382 = vmatpush1.msra.mxu0 %v222
    %383 = vmatprep.subr.mxu0 0.0
    %384 = vmatpush1.msra.mxu0 %v219
    %385 = vmatprep.subr.mxu0 0.0
    %386 = vmatpush1.msra.mxu0 %v216
    %387 = vmatprep.subr.mxu0 0.0
    %388 = vmatpush1.msra.mxu0 %v213
    %389 = vmatprep.subr.mxu0 0.0
    %390 = vmatpush1.msra.mxu0 %v210
    %391 = vmatprep.subr.mxu0 0.0
    %392 = vmatpush1.msra.mxu0 %v207
    %393 = vmatprep.subr.mxu0 0.0
    %394 = vmatpush1.msra.mxu0 %v204
    %395 = vmatprep.subr.mxu0 0.0
    %396 = vmatpush2.msra.mxu0 0.0
    %397 = vmatprep.subr.mxu0 0.0
    %398 = vmatpush2.msra.mxu0 0.0
    %399 = vmatprep.subr.mxu0 0.0
    %400 = vmatpush2.msra.mxu0 0.0
    %401 = vmatprep.subr.mxu0 0.0
    %402 = vmatpush2.msra.mxu0 0.0
    %403 = vmatprep.subr.mxu0 0.0
    %404 = vmatpush2.msra.mxu0 0.0
    %405 = vmatprep.subr.mxu0 0.0
    %406 = vmatpush2.msra.mxu0 0.0
    %407 = vmatprep.subr.mxu0 0.0
    %408 = vmatpush2.msra.mxu0 0.0
    %409 = vmatprep.subr.mxu0 0.0
    %410 = vmatpush2.msra.mxu0 0.0
    %411 = vmatprep.subr.mxu0 0.0
    %412 = vmatpush2.msra.mxu0 0.0
    %413 = vmatprep.subr.mxu0 0.0
    %414 = vmatpush2.msra.mxu0 0.0
    %415 = vmatprep.subr.mxu0 0.0
    %416 = vmatpush2.msra.mxu0 0.0
    %417 = vmatprep.subr.mxu0 0.0
    %418 = vmatpush2.msra.mxu0 0.0
    %419 = vmatprep.subr.mxu0 0.0
    %420 = vmatpush2.msra.mxu0 0.0
    %421 = vmatprep.subr.mxu0 0.0
    %422 = vmatpush2.msra.mxu0 0.0
    %423 = vmatprep.subr.mxu0 0.0
    %424 = vmatpush2.msra.mxu0 0.0
    %425 = vmatprep.subr.mxu0 0.0
    %426 = vmatpush2.msra.mxu0 0.0
    %427 = vmatprep.mubr.f32.mxu0 0.0
    %428 = vmatmul.mubr.f32.gmra.mxu0 %v194
    %v429 = vpop.f32.mrf.mxu0
    %v430 = vadd.f32 0.0, %v429
    %v431 = vpop.f32.mrf.mxu0
    %432 = vmatprep.mubr.f32.mxu0 0.0
    %433 = vmatmul.mubr.f32.gmra.mxu0 %v195
    %v434 = vpop.f32.mrf.mxu0
    %v435 = vadd.f32 0.0, %v434
    %v436 = vpop.f32.mrf.mxu0
    %437 = vmatprep.mubr.f32.mxu0 0.0
    %438 = vmatmul.mubr.f32.gmra.mxu0 %v196
    %v439 = vpop.f32.mrf.mxu0
    %v440 = vadd.f32 0.0, %v439
    %v441 = vpop.f32.mrf.mxu0
    %442 = vmatprep.mubr.f32.mxu0 0.0
    %443 = vmatmul.mubr.f32.gmra.mxu0 %v197
    %v444 = vpop.f32.mrf.mxu0
    %v445 = vadd.f32 0.0, %v444
    %v446 = vpop.f32.mrf.mxu0
    %447 = vmatprep.mubr.f32.mxu0 0.0
    %448 = vmatmul.mubr.f32.gmra.mxu0 %v198
    %v449 = vpop.f32.mrf.mxu0
    %v450 = vadd.f32 0.0, %v449
    %v451 = vpop.f32.mrf.mxu0
    %452 = vmatprep.mubr.f32.mxu0 0.0
    %453 = vmatmul.mubr.f32.gmra.mxu0 %v199
    %v454 = vpop.f32.mrf.mxu0
    %v455 = vadd.f32 0.0, %v454
    %v456 = vpop.f32.mrf.mxu0
    %457 = vmatprep.mubr.f32.mxu0 0.0
    %458 = vmatmul.mubr.f32.gmra.mxu0 %v200
    %v459 = vpop.f32.mrf.mxu0
    %v460 = vadd.f32 0.0, %v459
    %v461 = vpop.f32.mrf.mxu0
    %462 = vmatprep.mubr.f32.mxu0 0.0
    %463 = vmatmul.mubr.f32.gmra.mxu0 %v201
    %v464 = vpop.f32.mrf.mxu0
    %v465 = vadd.f32 0.0, %v464
    %v466 = vpop.f32.mrf.mxu0
    %467 = vdwg.mxu0
    %468 = vst [vmem:[#allocation2] sm:$0xff] %v317
    %469 = vst [vmem:[#allocation2 + $0x8] sm:$0xff] %v319
    %470 = vst [vmem:[#allocation2 + $0x10] sm:$0xff] %v430
    %471 = vst [vmem:[#allocation2 + $0x18] sm:$0xff] %v323
    %472 = vst [vmem:[#allocation2 + $0x20] sm:$0xff] %v325
    %473 = vst [vmem:[#allocation2 + $0x28] sm:$0xff] %v435
    %474 = vst [vmem:[#allocation2 + $0x30] sm:$0xff] %v329
    %475 = vst [vmem:[#allocation2 + $0x38] sm:$0xff] %v331
    %476 = vst [vmem:[#allocation2 + $0x40] sm:$0xff] %v440
    %477 = vst [vmem:[#allocation2 + $0x48] sm:$0xff] %v335
    %478 = vst [vmem:[#allocation2 + $0x50] sm:$0xff] %v337
    %479 = vst [vmem:[#allocation2 + $0x58] sm:$0xff] %v445
    %480 = vst [vmem:[#allocation2 + $0x60] sm:$0xff] %v341
    %481 = vst [vmem:[#allocation2 + $0x68] sm:$0xff] %v343
    %482 = vst [vmem:[#allocation2 + $0x70] sm:$0xff] %v450
    %483 = vst [vmem:[#allocation2 + $0x78] sm:$0xff] %v347
    %484 = vst [vmem:[#allocation2 + $0x80] sm:$0xff] %v349
    %485 = vst [vmem:[#allocation2 + $0x88] sm:$0xff] %v455
    %486 = vst [vmem:[#allocation2 + $0x90] sm:$0xff] %v353
    %487 = vst [vmem:[#allocation2 + $0x98] sm:$0xff] %v355
    %488 = vst [vmem:[#allocation2 + $0xa0] sm:$0xff] %v460
    %489 = vst [vmem:[#allocation2 + $0xa8] sm:$0xff] %v359
    %490 = vst [vmem:[#allocation2 + $0xb0] sm:$0xff] %v361
    %491 = vst [vmem:[#allocation2 + $0xb8] sm:$0xff] %v465
    %v492 = vld [vmem:[#allocation6] sm:$0xff]
    %v493 = vld [vmem:[#allocation6 + $0x8] sm:$0xff]
    %v494 = vld [vmem:[#allocation6 + $0x10] sm:$0xff]
    %v495 = vld [vmem:[#allocation6 + $0x18] sm:$0xff]
    %v496 = vld [vmem:[#allocation6 + $0x20] sm:$0xff]
    %v497 = vld [vmem:[#allocation6 + $0x28] sm:$0xff]
    %v498 = vld [vmem:[#allocation6 + $0x30] sm:$0xff]
    %v499 = vld [vmem:[#allocation6 + $0x38] sm:$0xff]
    %v500 = vld [vmem:[#allocation6 + $0x40] sm:$0xff]
    %v501 = vld [vmem:[#allocation6 + $0x48] sm:$0xff]
    %v502 = vld [vmem:[#allocation6 + $0x50] sm:$0xff]
    %v503 = vld [vmem:[#allocation6 + $0x58] sm:$0xff]
    %v504 = vld [vmem:[#allocation6 + $0x60] sm:$0xff]
    %v505 = vld [vmem:[#allocation6 + $0x68] sm:$0xff]
    %v506 = vld [vmem:[#allocation6 + $0x70] sm:$0xff]
    %v507 = vld [vmem:[#allocation6 + $0x78] sm:$0xff]
    %v508 = vld [vmem:[#allocation6 + $0x80] sm:$0xff]
    %v509 = vld [vmem:[#allocation6 + $0x88] sm:$0xff]
    %v510 = vld [vmem:[#allocation6 + $0x90] sm:$0xff]
    %v511 = vld [vmem:[#allocation6 + $0x98] sm:$0xff]
    %v512 = vld [vmem:[#allocation6 + $0xa0] sm:$0xff]
    %v513 = vld [vmem:[#allocation6 + $0xa8] sm:$0xff]
    %v514 = vld [vmem:[#allocation6 + $0xb0] sm:$0xff]
    %v515 = vld [vmem:[#allocation6 + $0xb8] sm:$0xff]
    %v516 = vld [vmem:[#allocation6 + $0xc0] sm:$0xff]
    %v517 = vld [vmem:[#allocation6 + $0xc8] sm:$0xff]
    %v518 = vld [vmem:[#allocation6 + $0xd0] sm:$0xff]
    %v519 = vld [vmem:[#allocation6 + $0xd8] sm:$0xff]
    %v520 = vld [vmem:[#allocation6 + $0xe0] sm:$0xff]
    %v521 = vld [vmem:[#allocation6 + $0xe8] sm:$0xff]
    %v522 = vld [vmem:[#allocation6 + $0xf0] sm:$0xff]
    %v523 = vld [vmem:[#allocation6 + $0xf8] sm:$0xff]
    %v524 = vld [vmem:[#allocation6 + $0x100] sm:$0xff]
    %v525 = vld [vmem:[#allocation6 + $0x108] sm:$0xff]
    %v526 = vld [vmem:[#allocation6 + $0x110] sm:$0xff]
    %v527 = vld [vmem:[#allocation6 + $0x118] sm:$0xff]
    %v528 = vld [vmem:[#allocation6 + $0x120] sm:$0xff]
    %v529 = vld [vmem:[#allocation6 + $0x128] sm:$0xff]
    %v530 = vld [vmem:[#allocation6 + $0x130] sm:$0xff]
    %v531 = vld [vmem:[#allocation6 + $0x138] sm:$0xff]
    %v532 = vld [vmem:[#allocation6 + $0x140] sm:$0xff]
    %v533 = vld [vmem:[#allocation6 + $0x148] sm:$0xff]
    %v534 = vld [vmem:[#allocation6 + $0x150] sm:$0xff]
    %v535 = vld [vmem:[#allocation6 + $0x158] sm:$0xff]
    %v536 = vld [vmem:[#allocation6 + $0x160] sm:$0xff]
    %v537 = vld [vmem:[#allocation6 + $0x168] sm:$0xff]
    %v538 = vld [vmem:[#allocation6 + $0x170] sm:$0xff]
    %v539 = vld [vmem:[#allocation6 + $0x178] sm:$0xff]
    %v540 = vld [vmem:[%s3] sm:$0x1]
    %v542 = vlaneseq
    %v543 = vshrl.u32 %v542, 7
    %v544 = vsub.s32 0, %v543
    %v545 = vrot.slane %v540, %v544
    %v547 = vld [vmem:[#allocation2] sm:$0xff]
    %v548 = vld [vmem:[#allocation2 + $0x8] sm:$0xff]
    %v549 = vld [vmem:[#allocation2 + $0x10] sm:$0xff]
    %550 = vmatprep.subr.mxu0 %v538
    %551 = vmatpush1.msra.mxu0 %v537
    %552 = vmatprep.subr.mxu0 %v535
    %553 = vmatpush1.msra.mxu0 %v534
    %554 = vmatprep.subr.mxu0 %v532
    %555 = vmatpush1.msra.mxu0 %v531
    %556 = vmatprep.subr.mxu0 %v529
    %557 = vmatpush1.msra.mxu0 %v528
    %558 = vmatprep.subr.mxu0 %v526
    %559 = vmatpush1.msra.mxu0 %v525
    %560 = vmatprep.subr.mxu0 %v523
    %561 = vmatpush1.msra.mxu0 %v522
    %562 = vmatprep.subr.mxu0 %v520
    %563 = vmatpush1.msra.mxu0 %v519
    %564 = vmatprep.subr.mxu0 %v517
    %565 = vmatpush1.msra.mxu0 %v516
    %566 = vmatprep.subr.mxu0 %v514
    %567 = vmatpush1.msra.mxu0 %v513
    %568 = vmatprep.subr.mxu0 %v511
    %569 = vmatpush1.msra.mxu0 %v510
    %570 = vmatprep.subr.mxu0 %v508
    %571 = vmatpush1.msra.mxu0 %v507
    %572 = vmatprep.subr.mxu0 %v505
    %573 = vmatpush1.msra.mxu0 %v504
    %574 = vmatprep.subr.mxu0 %v502
    %575 = vmatpush1.msra.mxu0 %v501
    %576 = vmatprep.subr.mxu0 %v499
    %577 = vmatpush1.msra.mxu0 %v498
    %578 = vmatprep.subr.mxu0 %v496
    %579 = vmatpush1.msra.mxu0 %v495
    %580 = vmatprep.subr.mxu0 %v493
    %581 = vmatpush1.msra.mxu0 %v492
    %582 = vmatprep.subr.mxu0 0.0
    %583 = vmatpush2.msra.mxu0 0.0
    %584 = vmatprep.subr.mxu0 0.0
    %585 = vmatpush2.msra.mxu0 0.0
    %586 = vmatprep.subr.mxu0 0.0
    %587 = vmatpush2.msra.mxu0 0.0
    %588 = vmatprep.subr.mxu0 0.0
    %589 = vmatpush2.msra.mxu0 0.0
    %590 = vmatprep.subr.mxu0 0.0
    %591 = vmatpush2.msra.mxu0 0.0
    %592 = vmatprep.subr.mxu0 0.0
    %593 = vmatpush2.msra.mxu0 0.0
    %594 = vmatprep.subr.mxu0 0.0
    %595 = vmatpush2.msra.mxu0 0.0
    %596 = vmatprep.subr.mxu0 0.0
    %597 = vmatpush2.msra.mxu0 0.0
    %598 = vmatprep.subr.mxu0 0.0
    %599 = vmatpush2.msra.mxu0 0.0
    %600 = vmatprep.subr.mxu0 0.0
    %601 = vmatpush2.msra.mxu0 0.0
    %602 = vmatprep.subr.mxu0 0.0
    %603 = vmatpush2.msra.mxu0 0.0
    %604 = vmatprep.subr.mxu0 0.0
    %605 = vmatpush2.msra.mxu0 0.0
    %606 = vmatprep.subr.mxu0 0.0
    %607 = vmatpush2.msra.mxu0 0.0
    %608 = vmatprep.subr.mxu0 0.0
    %609 = vmatpush2.msra.mxu0 0.0
    %610 = vmatprep.subr.mxu0 0.0
    %611 = vmatpush2.msra.mxu0 0.0
    %612 = vmatprep.subr.mxu0 0.0
    %613 = vmatpush2.msra.mxu0 0.0
    %614 = vmatprep.mubr.f32.mxu0 0.0
    %615 = vmatmul.mubr.f32.gmra.mxu0 0.0
    %v616 = vpop.f32.mrf.mxu0
    %v617 = vadd.f32 0.0, %v616
    %v618 = vpop.f32.mrf.mxu0
    %v619 = vadd.f32 0.0, %v618
    %620 = vdwg.mxu0
    %621 = vmatprep.subr.mxu0 0.0
    %622 = vmatpush1.msra.mxu0 %v539
    %623 = vmatprep.subr.mxu0 0.0
    %624 = vmatpush1.msra.mxu0 %v536
    %625 = vmatprep.subr.mxu0 0.0
    %626 = vmatpush1.msra.mxu0 %v533
    %627 = vmatprep.subr.mxu0 0.0
    %628 = vmatpush1.msra.mxu0 %v530
    %629 = vmatprep.subr.mxu0 0.0
    %630 = vmatpush1.msra.mxu0 %v527
    %631 = vmatprep.subr.mxu0 0.0
    %632 = vmatpush1.msra.mxu0 %v524
    %633 = vmatprep.subr.mxu0 0.0
    %634 = vmatpush1.msra.mxu0 %v521
    %635 = vmatprep.subr.mxu0 0.0
    %636 = vmatpush1.msra.mxu0 %v518
    %637 = vmatprep.subr.mxu0 0.0
    %638 = vmatpush1.msra.mxu0 %v515
    %639 = vmatprep.subr.mxu0 0.0
    %640 = vmatpush1.msra.mxu0 %v512
    %641 = vmatprep.subr.mxu0 0.0
    %642 = vmatpush1.msra.mxu0 %v509
    %643 = vmatprep.subr.mxu0 0.0
    %644 = vmatpush1.msra.mxu0 %v506
    %645 = vmatprep.subr.mxu0 0.0
    %646 = vmatpush1.msra.mxu0 %v503
    %647 = vmatprep.subr.mxu0 0.0
    %648 = vmatpush1.msra.mxu0 %v500
    %649 = vmatprep.subr.mxu0 0.0
    %650 = vmatpush1.msra.mxu0 %v497
    %651 = vmatprep.subr.mxu0 0.0
    %652 = vmatpush1.msra.mxu0 %v494
    %653 = vmatprep.subr.mxu0 0.0
    %654 = vmatpush2.msra.mxu0 0.0
    %655 = vmatprep.subr.mxu0 0.0
    %656 = vmatpush2.msra.mxu0 0.0
    %657 = vmatprep.subr.mxu0 0.0
    %658 = vmatpush2.msra.mxu0 0.0
    %659 = vmatprep.subr.mxu0 0.0
    %660 = vmatpush2.msra.mxu0 0.0
    %661 = vmatprep.subr.mxu0 0.0
    %662 = vmatpush2.msra.mxu0 0.0
    %663 = vmatprep.subr.mxu0 0.0
    %664 = vmatpush2.msra.mxu0 0.0
    %665 = vmatprep.subr.mxu0 0.0
    %666 = vmatpush2.msra.mxu0 0.0
    %667 = vmatprep.subr.mxu0 0.0
    %668 = vmatpush2.msra.mxu0 0.0
    %669 = vmatprep.subr.mxu0 0.0
    %670 = vmatpush2.msra.mxu0 0.0
    %671 = vmatprep.subr.mxu0 0.0
    %672 = vmatpush2.msra.mxu0 0.0
    %673 = vmatprep.subr.mxu0 0.0
    %674 = vmatpush2.msra.mxu0 0.0
    %675 = vmatprep.subr.mxu0 0.0
    %676 = vmatpush2.msra.mxu0 0.0
    %677 = vmatprep.subr.mxu0 0.0
    %678 = vmatpush2.msra.mxu0 0.0
    %679 = vmatprep.subr.mxu0 0.0
    %680 = vmatpush2.msra.mxu0 0.0
    %681 = vmatprep.subr.mxu0 0.0
    %682 = vmatpush2.msra.mxu0 0.0
    %683 = vmatprep.subr.mxu0 0.0
    %684 = vmatpush2.msra.mxu0 0.0
    %685 = vmatprep.mubr.f32.mxu0 0.0
    %686 = vmatmul.mubr.f32.gmra.mxu0 0.0
    %v687 = vpop.f32.mrf.mxu0
    %v688 = vadd.f32 0.0, %v687
    %v689 = vpop.f32.mrf.mxu0
    %690 = vdwg.mxu0
    %v691 = vadd.f32 %v547, %v617
    %v692 = vxor.u32 %v691, 2147483648
    %v693 = vmul.f32 %v692, 1.442695
    %v694 = vpow.pop %v693
    %v695 = vadd.f32 %v694, 1.0
    %v696 = vrcp.pop %v695
    %v697 = vmul.f32 1.0, %v696
    %v698 = vadd.f32 %v548, %v619
    %v699 = vxor.u32 %v698, 2147483648
    %v700 = vmul.f32 %v699, 1.442695
    %v701 = vpow.pop %v700
    %v702 = vadd.f32 %v701, 1.0
    %v703 = vrcp.pop %v702
    %v704 = vmul.f32 1.0, %v703
    %v705 = vadd.f32 %v688, %v545
    %v706 = vmul.f32 %v697, %v705
    %v707 = vadd.f32 %v549, %v706
    %v708 = vtanh.pop %v707
    %v709 = vsub.f32 0.0, %v708
    %v710 = vmul.f32 %v704, %v709
    %v711 = vadd.f32 %v708, %v710
    %s712 = scalar_lea.vmem [#allocation2], 24
    %v713 = vld [vmem:[%s712] sm:$0xff]
    %v714 = vld [vmem:[%s712 + $0x8] sm:$0xff]
    %v715 = vld [vmem:[%s712 + $0x10] sm:$0xff]
    %716 = vmatprep.subr.mxu0 %v538
    %717 = vmatpush1.msra.mxu0 %v537
    %718 = vmatprep.subr.mxu0 %v535
    %719 = vmatpush1.msra.mxu0 %v534
    %720 = vmatprep.subr.mxu0 %v532
    %721 = vmatpush1.msra.mxu0 %v531
    %722 = vmatprep.subr.mxu0 %v529
    %723 = vmatpush1.msra.mxu0 %v528
    %724 = vmatprep.subr.mxu0 %v526
    %725 = vmatpush1.msra.mxu0 %v525
    %726 = vmatprep.subr.mxu0 %v523
    %727 = vmatpush1.msra.mxu0 %v522
    %728 = vmatprep.subr.mxu0 %v520
    %729 = vmatpush1.msra.mxu0 %v519
    %730 = vmatprep.subr.mxu0 %v517
    %731 = vmatpush1.msra.mxu0 %v516
    %732 = vmatprep.subr.mxu0 %v514
    %733 = vmatpush1.msra.mxu0 %v513
    %734 = vmatprep.subr.mxu0 %v511
    %735 = vmatpush1.msra.mxu0 %v510
    %736 = vmatprep.subr.mxu0 %v508
    %737 = vmatpush1.msra.mxu0 %v507
    %738 = vmatprep.subr.mxu0 %v505
    %739 = vmatpush1.msra.mxu0 %v504
    %740 = vmatprep.subr.mxu0 %v502
    %741 = vmatpush1.msra.mxu0 %v501
    %742 = vmatprep.subr.mxu0 %v499
    %743 = vmatpush1.msra.mxu0 %v498
    %744 = vmatprep.subr.mxu0 %v496
    %745 = vmatpush1.msra.mxu0 %v495
    %746 = vmatprep.subr.mxu0 %v493
    %747 = vmatpush1.msra.mxu0 %v492
    %748 = vmatprep.subr.mxu0 0.0
    %749 = vmatpush2.msra.mxu0 0.0
    %750 = vmatprep.subr.mxu0 0.0
    %751 = vmatpush2.msra.mxu0 0.0
    %752 = vmatprep.subr.mxu0 0.0
    %753 = vmatpush2.msra.mxu0 0.0
    %754 = vmatprep.subr.mxu0 0.0
    %755 = vmatpush2.msra.mxu0 0.0
    %756 = vmatprep.subr.mxu0 0.0
    %757 = vmatpush2.msra.mxu0 0.0
    %758 = vmatprep.subr.mxu0 0.0
    %759 = vmatpush2.msra.mxu0 0.0
    %760 = vmatprep.subr.mxu0 0.0
    %761 = vmatpush2.msra.mxu0 0.0
    %762 = vmatprep.subr.mxu0 0.0
    %763 = vmatpush2.msra.mxu0 0.0
    %764 = vmatprep.subr.mxu0 0.0
    %765 = vmatpush2.msra.mxu0 0.0
    %766 = vmatprep.subr.mxu0 0.0
    %767 = vmatpush2.msra.mxu0 0.0
    %768 = vmatprep.subr.mxu0 0.0
    %769 = vmatpush2.msra.mxu0 0.0
    %770 = vmatprep.subr.mxu0 0.0
    %771 = vmatpush2.msra.mxu0 0.0
    %772 = vmatprep.subr.mxu0 0.0
    %773 = vmatpush2.msra.mxu0 0.0
    %774 = vmatprep.subr.mxu0 0.0
    %775 = vmatpush2.msra.mxu0 0.0
    %776 = vmatprep.subr.mxu0 0.0
    %777 = vmatpush2.msra.mxu0 0.0
    %778 = vmatprep.subr.mxu0 0.0
    %779 = vmatpush2.msra.mxu0 0.0
    %780 = vmatprep.mubr.f32.mxu0 0.0
    %781 = vmatmul.mubr.f32.gmra.mxu0 %v711
    %v782 = vpop.f32.mrf.mxu0
    %v783 = vadd.f32 0.0, %v782
    %v784 = vpop.f32.mrf.mxu0
    %v785 = vadd.f32 0.0, %v784
    %786 = vdwg.mxu0
    %787 = vmatprep.subr.mxu0 0.0
    %788 = vmatpush1.msra.mxu0 %v539
    %789 = vmatprep.subr.mxu0 0.0
    %790 = vmatpush1.msra.mxu0 %v536
    %791 = vmatprep.subr.mxu0 0.0
    %792 = vmatpush1.msra.mxu0 %v533
    %793 = vmatprep.subr.mxu0 0.0
    %794 = vmatpush1.msra.mxu0 %v530
    %795 = vmatprep.subr.mxu0 0.0
    %796 = vmatpush1.msra.mxu0 %v527
    %797 = vmatprep.subr.mxu0 0.0
    %798 = vmatpush1.msra.mxu0 %v524
    %799 = vmatprep.subr.mxu0 0.0
    %800 = vmatpush1.msra.mxu0 %v521
    %801 = vmatprep.subr.mxu0 0.0
    %802 = vmatpush1.msra.mxu0 %v518
    %803 = vmatprep.subr.mxu0 0.0
    %804 = vmatpush1.msra.mxu0 %v515
    %805 = vmatprep.subr.mxu0 0.0
    %806 = vmatpush1.msra.mxu0 %v512
    %807 = vmatprep.subr.mxu0 0.0
    %808 = vmatpush1.msra.mxu0 %v509
    %809 = vmatprep.subr.mxu0 0.0
    %810 = vmatpush1.msra.mxu0 %v506
    %811 = vmatprep.subr.mxu0 0.0
    %812 = vmatpush1.msra.mxu0 %v503
    %813 = vmatprep.subr.mxu0 0.0
    %814 = vmatpush1.msra.mxu0 %v500
    %815 = vmatprep.subr.mxu0 0.0
    %816 = vmatpush1.msra.mxu0 %v497
    %817 = vmatprep.subr.mxu0 0.0
    %818 = vmatpush1.msra.mxu0 %v494
    %819 = vmatprep.subr.mxu0 0.0
    %820 = vmatpush2.msra.mxu0 0.0
    %821 = vmatprep.subr.mxu0 0.0
    %822 = vmatpush2.msra.mxu0 0.0
    %823 = vmatprep.subr.mxu0 0.0
    %824 = vmatpush2.msra.mxu0 0.0
    %825 = vmatprep.subr.mxu0 0.0
    %826 = vmatpush2.msra.mxu0 0.0
    %827 = vmatprep.subr.mxu0 0.0
    %828 = vmatpush2.msra.mxu0 0.0
    %829 = vmatprep.subr.mxu0 0.0
    %830 = vmatpush2.msra.mxu0 0.0
    %831 = vmatprep.subr.mxu0 0.0
    %832 = vmatpush2.msra.mxu0 0.0
    %833 = vmatprep.subr.mxu0 0.0
    %834 = vmatpush2.msra.mxu0 0.0
    %835 = vmatprep.subr.mxu0 0.0
    %836 = vmatpush2.msra.mxu0 0.0
    %837 = vmatprep.subr.mxu0 0.0
    %838 = vmatpush2.msra.mxu0 0.0
    %839 = vmatprep.subr.mxu0 0.0
    %840 = vmatpush2.msra.mxu0 0.0
    %841 = vmatprep.subr.mxu0 0.0
    %842 = vmatpush2.msra.mxu0 0.0
    %843 = vmatprep.subr.mxu0 0.0
    %844 = vmatpush2.msra.mxu0 0.0
    %845 = vmatprep.subr.mxu0 0.0
    %846 = vmatpush2.msra.mxu0 0.0
    %847 = vmatprep.subr.mxu0 0.0
    %848 = vmatpush2.msra.mxu0 0.0
    %849 = vmatprep.subr.mxu0 0.0
    %850 = vmatpush2.msra.mxu0 0.0
    %851 = vmatprep.mubr.f32.mxu0 0.0
    %852 = vmatmul.mubr.f32.gmra.mxu0 %v711
    %v853 = vpop.f32.mrf.mxu0
    %v854 = vadd.f32 0.0, %v853
    %v855 = vpop.f32.mrf.mxu0
    %856 = vdwg.mxu0
    %v857 = vadd.f32 %v713, %v783
    %v858 = vxor.u32 %v857, 2147483648
    %v859 = vmul.f32 %v858, 1.442695
    %v860 = vpow.pop %v859
    %v861 = vadd.f32 %v860, 1.0
    %v862 = vrcp.pop %v861
    %v863 = vmul.f32 1.0, %v862
    %v864 = vadd.f32 %v714, %v785
    %v865 = vxor.u32 %v864, 2147483648
    %v866 = vmul.f32 %v865, 1.442695
    %v867 = vpow.pop %v866
    %v868 = vadd.f32 %v867, 1.0
    %v869 = vrcp.pop %v868
    %v870 = vmul.f32 1.0, %v869
    %v871 = vadd.f32 %v854, %v545
    %v872 = vmul.f32 %v863, %v871
    %v873 = vadd.f32 %v715, %v872
    %v874 = vtanh.pop %v873
    %v875 = vsub.f32 %v711, %v874
    %v876 = vmul.f32 %v870, %v875
    %v877 = vadd.f32 %v874, %v876
    %s878 = scalar_lea.vmem [#allocation2], 48
    %v879 = vld [vmem:[%s878] sm:$0xff]
    %v880 = vld [vmem:[%s878 + $0x8] sm:$0xff]
    %v881 = vld [vmem:[%s878 + $0x10] sm:$0xff]
    %882 = vmatprep.subr.mxu0 %v538
    %883 = vmatpush1.msra.mxu0 %v537
    %884 = vmatprep.subr.mxu0 %v535
    %885 = vmatpush1.msra.mxu0 %v534
    %886 = vmatprep.subr.mxu0 %v532
    %887 = vmatpush1.msra.mxu0 %v531
    %888 = vmatprep.subr.mxu0 %v529
    %889 = vmatpush1.msra.mxu0 %v528
    %890 = vmatprep.subr.mxu0 %v526
    %891 = vmatpush1.msra.mxu0 %v525
    %892 = vmatprep.subr.mxu0 %v523
    %893 = vmatpush1.msra.mxu0 %v522
    %894 = vmatprep.subr.mxu0 %v520
    %895 = vmatpush1.msra.mxu0 %v519
    %896 = vmatprep.subr.mxu0 %v517
    %897 = vmatpush1.msra.mxu0 %v516
    %898 = vmatprep.subr.mxu0 %v514
    %899 = vmatpush1.msra.mxu0 %v513
    %900 = vmatprep.subr.mxu0 %v511
    %901 = vmatpush1.msra.mxu0 %v510
    %902 = vmatprep.subr.mxu0 %v508
    %903 = vmatpush1.msra.mxu0 %v507
    %904 = vmatprep.subr.mxu0 %v505
    %905 = vmatpush1.msra.mxu0 %v504
    %906 = vmatprep.subr.mxu0 %v502
    %907 = vmatpush1.msra.mxu0 %v501
    %908 = vmatprep.subr.mxu0 %v499
    %909 = vmatpush1.msra.mxu0 %v498
    %910 = vmatprep.subr.mxu0 %v496
    %911 = vmatpush1.msra.mxu0 %v495
    %912 = vmatprep.subr.mxu0 %v493
    %913 = vmatpush1.msra.mxu0 %v492
    %914 = vmatprep.subr.mxu0 0.0
    %915 = vmatpush2.msra.mxu0 0.0
    %916 = vmatprep.subr.mxu0 0.0
    %917 = vmatpush2.msra.mxu0 0.0
    %918 = vmatprep.subr.mxu0 0.0
    %919 = vmatpush2.msra.mxu0 0.0
    %920 = vmatprep.subr.mxu0 0.0
    %921 = vmatpush2.msra.mxu0 0.0
    %922 = vmatprep.subr.mxu0 0.0
    %923 = vmatpush2.msra.mxu0 0.0
    %924 = vmatprep.subr.mxu0 0.0
    %925 = vmatpush2.msra.mxu0 0.0
    %926 = vmatprep.subr.mxu0 0.0
    %927 = vmatpush2.msra.mxu0 0.0
    %928 = vmatprep.subr.mxu0 0.0
    %929 = vmatpush2.msra.mxu0 0.0
    %930 = vmatprep.subr.mxu0 0.0
    %931 = vmatpush2.msra.mxu0 0.0
    %932 = vmatprep.subr.mxu0 0.0
    %933 = vmatpush2.msra.mxu0 0.0
    %934 = vmatprep.subr.mxu0 0.0
    %935 = vmatpush2.msra.mxu0 0.0
    %936 = vmatprep.subr.mxu0 0.0
    %937 = vmatpush2.msra.mxu0 0.0
    %938 = vmatprep.subr.mxu0 0.0
    %939 = vmatpush2.msra.mxu0 0.0
    %940 = vmatprep.subr.mxu0 0.0
    %941 = vmatpush2.msra.mxu0 0.0
    %942 = vmatprep.subr.mxu0 0.0
    %943 = vmatpush2.msra.mxu0 0.0
    %944 = vmatprep.subr.mxu0 0.0
    %945 = vmatpush2.msra.mxu0 0.0
    %946 = vmatprep.mubr.f32.mxu0 0.0
    %947 = vmatmul.mubr.f32.gmra.mxu0 %v877
    %v948 = vpop.f32.mrf.mxu0
    %v949 = vadd.f32 0.0, %v948
    %v950 = vpop.f32.mrf.mxu0
    %v951 = vadd.f32 0.0, %v950
    %952 = vdwg.mxu0
    %953 = vmatprep.subr.mxu0 0.0
    %954 = vmatpush1.msra.mxu0 %v539
    %955 = vmatprep.subr.mxu0 0.0
    %956 = vmatpush1.msra.mxu0 %v536
    %957 = vmatprep.subr.mxu0 0.0
    %958 = vmatpush1.msra.mxu0 %v533
    %959 = vmatprep.subr.mxu0 0.0
    %960 = vmatpush1.msra.mxu0 %v530
    %961 = vmatprep.subr.mxu0 0.0
    %962 = vmatpush1.msra.mxu0 %v527
    %963 = vmatprep.subr.mxu0 0.0
    %964 = vmatpush1.msra.mxu0 %v524
    %965 = vmatprep.subr.mxu0 0.0
    %966 = vmatpush1.msra.mxu0 %v521
    %967 = vmatprep.subr.mxu0 0.0
    %968 = vmatpush1.msra.mxu0 %v518
    %969 = vmatprep.subr.mxu0 0.0
    %970 = vmatpush1.msra.mxu0 %v515
    %971 = vmatprep.subr.mxu0 0.0
    %972 = vmatpush1.msra.mxu0 %v512
    %973 = vmatprep.subr.mxu0 0.0
    %974 = vmatpush1.msra.mxu0 %v509
    %975 = vmatprep.subr.mxu0 0.0
    %976 = vmatpush1.msra.mxu0 %v506
    %977 = vmatprep.subr.mxu0 0.0
    %978 = vmatpush1.msra.mxu0 %v503
    %979 = vmatprep.subr.mxu0 0.0
    %980 = vmatpush1.msra.mxu0 %v500
    %981 = vmatprep.subr.mxu0 0.0
    %982 = vmatpush1.msra.mxu0 %v497
    %983 = vmatprep.subr.mxu0 0.0
    %984 = vmatpush1.msra.mxu0 %v494
    %985 = vmatprep.subr.mxu0 0.0
    %986 = vmatpush2.msra.mxu0 0.0
    %987 = vmatprep.subr.mxu0 0.0
    %988 = vmatpush2.msra.mxu0 0.0
    %989 = vmatprep.subr.mxu0 0.0
    %990 = vmatpush2.msra.mxu0 0.0
    %991 = vmatprep.subr.mxu0 0.0
    %992 = vmatpush2.msra.mxu0 0.0
    %993 = vmatprep.subr.mxu0 0.0
    %994 = vmatpush2.msra.mxu0 0.0
    %995 = vmatprep.subr.mxu0 0.0
    %996 = vmatpush2.msra.mxu0 0.0
    %997 = vmatprep.subr.mxu0 0.0
    %998 = vmatpush2.msra.mxu0 0.0
    %999 = vmatprep.subr.mxu0 0.0
    %1000 = vmatpush2.msra.mxu0 0.0
    %1001 = vmatprep.subr.mxu0 0.0
    %1002 = vmatpush2.msra.mxu0 0.0
    %1003 = vmatprep.subr.mxu0 0.0
    %1004 = vmatpush2.msra.mxu0 0.0
    %1005 = vmatprep.subr.mxu0 0.0
    %1006 = vmatpush2.msra.mxu0 0.0
    %1007 = vmatprep.subr.mxu0 0.0
    %1008 = vmatpush2.msra.mxu0 0.0
    %1009 = vmatprep.subr.mxu0 0.0
    %1010 = vmatpush2.msra.mxu0 0.0
    %1011 = vmatprep.subr.mxu0 0.0
    %1012 = vmatpush2.msra.mxu0 0.0
    %1013 = vmatprep.subr.mxu0 0.0
    %1014 = vmatpush2.msra.mxu0 0.0
    %1015 = vmatprep.subr.mxu0 0.0
    %1016 = vmatpush2.msra.mxu0 0.0
    %1017 = vmatprep.mubr.f32.mxu0 0.0
    %1018 = vmatmul.mubr.f32.gmra.mxu0 %v877
    %v1019 = vpop.f32.mrf.mxu0
    %v1020 = vadd.f32 0.0, %v1019
    %v1021 = vpop.f32.mrf.mxu0
    %1022 = vdwg.mxu0
    %v1023 = vadd.f32 %v879, %v949
    %v1024 = vxor.u32 %v1023, 2147483648
    %v1025 = vmul.f32 %v1024, 1.442695
    %v1026 = vpow.pop %v1025
    %v1027 = vadd.f32 %v1026, 1.0
    %v1028 = vrcp.pop %v1027
    %v1029 = vmul.f32 1.0, %v1028
    %v1030 = vadd.f32 %v880, %v951
    %v1031 = vxor.u32 %v1030, 2147483648
    %v1032 = vmul.f32 %v1031, 1.442695
    %v1033 = vpow.pop %v1032
    %v1034 = vadd.f32 %v1033, 1.0
    %v1035 = vrcp.pop %v1034
    %v1036 = vmul.f32 1.0, %v1035
    %v1037 = vadd.f32 %v1020, %v545
    %v1038 = vmul.f32 %v1029, %v1037
    %v1039 = vadd.f32 %v881, %v1038
    %v1040 = vtanh.pop %v1039
    %v1041 = vsub.f32 %v877, %v1040
    %v1042 = vmul.f32 %v1036, %v1041
    %v1043 = vadd.f32 %v1040, %v1042
    %s1044 = scalar_lea.vmem [#allocation2], 72
    %v1045 = vld [vmem:[%s1044] sm:$0xff]
    %v1046 = vld [vmem:[%s1044 + $0x8] sm:$0xff]
    %v1047 = vld [vmem:[%s1044 + $0x10] sm:$0xff]
    %1048 = vmatprep.subr.mxu0 %v538
    %1049 = vmatpush1.msra.mxu0 %v537
    %1050 = vmatprep.subr.mxu0 %v535
    %1051 = vmatpush1.msra.mxu0 %v534
    %1052 = vmatprep.subr.mxu0 %v532
    %1053 = vmatpush1.msra.mxu0 %v531
    %1054 = vmatprep.subr.mxu0 %v529
    %1055 = vmatpush1.msra.mxu0 %v528
    %1056 = vmatprep.subr.mxu0 %v526
    %1057 = vmatpush1.msra.mxu0 %v525
    %1058 = vmatprep.subr.mxu0 %v523
    %1059 = vmatpush1.msra.mxu0 %v522
    %1060 = vmatprep.subr.mxu0 %v520
    %1061 = vmatpush1.msra.mxu0 %v519
    %1062 = vmatprep.subr.mxu0 %v517
    %1063 = vmatpush1.msra.mxu0 %v516
    %1064 = vmatprep.subr.mxu0 %v514
    %1065 = vmatpush1.msra.mxu0 %v513
    %1066 = vmatprep.subr.mxu0 %v511
    %1067 = vmatpush1.msra.mxu0 %v510
    %1068 = vmatprep.subr.mxu0 %v508
    %1069 = vmatpush1.msra.mxu0 %v507
    %1070 = vmatprep.subr.mxu0 %v505
    %1071 = vmatpush1.msra.mxu0 %v504
    %1072 = vmatprep.subr.mxu0 %v502
    %1073 = vmatpush1.msra.mxu0 %v501
    %1074 = vmatprep.subr.mxu0 %v499
    %1075 = vmatpush1.msra.mxu0 %v498
    %1076 = vmatprep.subr.mxu0 %v496
    %1077 = vmatpush1.msra.mxu0 %v495
    %1078 = vmatprep.subr.mxu0 %v493
    %1079 = vmatpush1.msra.mxu0 %v492
    %1080 = vmatprep.subr.mxu0 0.0
    %1081 = vmatpush2.msra.mxu0 0.0
    %1082 = vmatprep.subr.mxu0 0.0
    %1083 = vmatpush2.msra.mxu0 0.0
    %1084 = vmatprep.subr.mxu0 0.0
    %1085 = vmatpush2.msra.mxu0 0.0
    %1086 = vmatprep.subr.mxu0 0.0
    %1087 = vmatpush2.msra.mxu0 0.0
    %1088 = vmatprep.subr.mxu0 0.0
    %1089 = vmatpush2.msra.mxu0 0.0
    %1090 = vmatprep.subr.mxu0 0.0
    %1091 = vmatpush2.msra.mxu0 0.0
    %1092 = vmatprep.subr.mxu0 0.0
    %1093 = vmatpush2.msra.mxu0 0.0
    %1094 = vmatprep.subr.mxu0 0.0
    %1095 = vmatpush2.msra.mxu0 0.0
    %1096 = vmatprep.subr.mxu0 0.0
    %1097 = vmatpush2.msra.mxu0 0.0
    %1098 = vmatprep.subr.mxu0 0.0
    %1099 = vmatpush2.msra.mxu0 0.0
    %1100 = vmatprep.subr.mxu0 0.0
    %1101 = vmatpush2.msra.mxu0 0.0
    %1102 = vmatprep.subr.mxu0 0.0
    %1103 = vmatpush2.msra.mxu0 0.0
    %1104 = vmatprep.subr.mxu0 0.0
    %1105 = vmatpush2.msra.mxu0 0.0
    %1106 = vmatprep.subr.mxu0 0.0
    %1107 = vmatpush2.msra.mxu0 0.0
    %1108 = vmatprep.subr.mxu0 0.0
    %1109 = vmatpush2.msra.mxu0 0.0
    %1110 = vmatprep.subr.mxu0 0.0
    %1111 = vmatpush2.msra.mxu0 0.0
    %1112 = vmatprep.mubr.f32.mxu0 0.0
    %1113 = vmatmul.mubr.f32.gmra.mxu0 %v1043
    %v1114 = vpop.f32.mrf.mxu0
    %v1115 = vadd.f32 0.0, %v1114
    %v1116 = vpop.f32.mrf.mxu0
    %v1117 = vadd.f32 0.0, %v1116
    %1118 = vdwg.mxu0
    %1119 = vmatprep.subr.mxu0 0.0
    %1120 = vmatpush1.msra.mxu0 %v539
    %1121 = vmatprep.subr.mxu0 0.0
    %1122 = vmatpush1.msra.mxu0 %v536
    %1123 = vmatprep.subr.mxu0 0.0
    %1124 = vmatpush1.msra.mxu0 %v533
    %1125 = vmatprep.subr.mxu0 0.0
    %1126 = vmatpush1.msra.mxu0 %v530
    %1127 = vmatprep.subr.mxu0 0.0
    %1128 = vmatpush1.msra.mxu0 %v527
    %1129 = vmatprep.subr.mxu0 0.0
    %1130 = vmatpush1.msra.mxu0 %v524
    %1131 = vmatprep.subr.mxu0 0.0
    %1132 = vmatpush1.msra.mxu0 %v521
    %1133 = vmatprep.subr.mxu0 0.0
    %1134 = vmatpush1.msra.mxu0 %v518
    %1135 = vmatprep.subr.mxu0 0.0
    %1136 = vmatpush1.msra.mxu0 %v515
    %1137 = vmatprep.subr.mxu0 0.0
    %1138 = vmatpush1.msra.mxu0 %v512
    %1139 = vmatprep.subr.mxu0 0.0
    %1140 = vmatpush1.msra.mxu0 %v509
    %1141 = vmatprep.subr.mxu0 0.0
    %1142 = vmatpush1.msra.mxu0 %v506
    %1143 = vmatprep.subr.mxu0 0.0
    %1144 = vmatpush1.msra.mxu0 %v503
    %1145 = vmatprep.subr.mxu0 0.0
    %1146 = vmatpush1.msra.mxu0 %v500
    %1147 = vmatprep.subr.mxu0 0.0
    %1148 = vmatpush1.msra.mxu0 %v497
    %1149 = vmatprep.subr.mxu0 0.0
    %1150 = vmatpush1.msra.mxu0 %v494
    %1151 = vmatprep.subr.mxu0 0.0
    %1152 = vmatpush2.msra.mxu0 0.0
    %1153 = vmatprep.subr.mxu0 0.0
    %1154 = vmatpush2.msra.mxu0 0.0
    %1155 = vmatprep.subr.mxu0 0.0
    %1156 = vmatpush2.msra.mxu0 0.0
    %1157 = vmatprep.subr.mxu0 0.0
    %1158 = vmatpush2.msra.mxu0 0.0
    %1159 = vmatprep.subr.mxu0 0.0
    %1160 = vmatpush2.msra.mxu0 0.0
    %1161 = vmatprep.subr.mxu0 0.0
    %1162 = vmatpush2.msra.mxu0 0.0
    %1163 = vmatprep.subr.mxu0 0.0
    %1164 = vmatpush2.msra.mxu0 0.0
    %1165 = vmatprep.subr.mxu0 0.0
    %1166 = vmatpush2.msra.mxu0 0.0
    %1167 = vmatprep.subr.mxu0 0.0
    %1168 = vmatpush2.msra.mxu0 0.0
    %1169 = vmatprep.subr.mxu0 0.0
    %1170 = vmatpush2.msra.mxu0 0.0
    %1171 = vmatprep.subr.mxu0 0.0
    %1172 = vmatpush2.msra.mxu0 0.0
    %1173 = vmatprep.subr.mxu0 0.0
    %1174 = vmatpush2.msra.mxu0 0.0
    %1175 = vmatprep.subr.mxu0 0.0
    %1176 = vmatpush2.msra.mxu0 0.0
    %1177 = vmatprep.subr.mxu0 0.0
    %1178 = vmatpush2.msra.mxu0 0.0
    %1179 = vmatprep.subr.mxu0 0.0
    %1180 = vmatpush2.msra.mxu0 0.0
    %1181 = vmatprep.subr.mxu0 0.0
    %1182 = vmatpush2.msra.mxu0 0.0
    %1183 = vmatprep.mubr.f32.mxu0 0.0
    %1184 = vmatmul.mubr.f32.gmra.mxu0 %v1043
    %v1185 = vpop.f32.mrf.mxu0
    %v1186 = vadd.f32 0.0, %v1185
    %v1187 = vpop.f32.mrf.mxu0
    %1188 = vdwg.mxu0
    %v1189 = vadd.f32 %v1045, %v1115
    %v1190 = vxor.u32 %v1189, 2147483648
    %v1191 = vmul.f32 %v1190, 1.442695
    %v1192 = vpow.pop %v1191
    %v1193 = vadd.f32 %v1192, 1.0
    %v1194 = vrcp.pop %v1193
    %v1195 = vmul.f32 1.0, %v1194
    %v1196 = vadd.f32 %v1046, %v1117
    %v1197 = vxor.u32 %v1196, 2147483648
    %v1198 = vmul.f32 %v1197, 1.442695
    %v1199 = vpow.pop %v1198
    %v1200 = vadd.f32 %v1199, 1.0
    %v1201 = vrcp.pop %v1200
    %v1202 = vmul.f32 1.0, %v1201
    %v1203 = vadd.f32 %v1186, %v545
    %v1204 = vmul.f32 %v1195, %v1203
    %v1205 = vadd.f32 %v1047, %v1204
    %v1206 = vtanh.pop %v1205
    %v1207 = vsub.f32 %v1043, %v1206
    %v1208 = vmul.f32 %v1202, %v1207
    %v1209 = vadd.f32 %v1206, %v1208
    %s1210 = scalar_lea.vmem [#allocation2], 96
    %v1211 = vld [vmem:[%s1210] sm:$0xff]
    %v1212 = vld [vmem:[%s1210 + $0x8] sm:$0xff]
    %v1213 = vld [vmem:[%s1210 + $0x10] sm:$0xff]
    %1214 = vmatprep.subr.mxu0 %v538
    %1215 = vmatpush1.msra.mxu0 %v537
    %1216 = vmatprep.subr.mxu0 %v535
    %1217 = vmatpush1.msra.mxu0 %v534
    %1218 = vmatprep.subr.mxu0 %v532
    %1219 = vmatpush1.msra.mxu0 %v531
    %1220 = vmatprep.subr.mxu0 %v529
    %1221 = vmatpush1.msra.mxu0 %v528
    %1222 = vmatprep.subr.mxu0 %v526
    %1223 = vmatpush1.msra.mxu0 %v525
    %1224 = vmatprep.subr.mxu0 %v523
    %1225 = vmatpush1.msra.mxu0 %v522
    %1226 = vmatprep.subr.mxu0 %v520
    %1227 = vmatpush1.msra.mxu0 %v519
    %1228 = vmatprep.subr.mxu0 %v517
    %1229 = vmatpush1.msra.mxu0 %v516
    %1230 = vmatprep.subr.mxu0 %v514
    %1231 = vmatpush1.msra.mxu0 %v513
    %1232 = vmatprep.subr.mxu0 %v511
    %1233 = vmatpush1.msra.mxu0 %v510
    %1234 = vmatprep.subr.mxu0 %v508
    %1235 = vmatpush1.msra.mxu0 %v507
    %1236 = vmatprep.subr.mxu0 %v505
    %1237 = vmatpush1.msra.mxu0 %v504
    %1238 = vmatprep.subr.mxu0 %v502
    %1239 = vmatpush1.msra.mxu0 %v501
    %1240 = vmatprep.subr.mxu0 %v499
    %1241 = vmatpush1.msra.mxu0 %v498
    %1242 = vmatprep.subr.mxu0 %v496
    %1243 = vmatpush1.msra.mxu0 %v495
    %1244 = vmatprep.subr.mxu0 %v493
    %1245 = vmatpush1.msra.mxu0 %v492
    %1246 = vmatprep.subr.mxu0 0.0
    %1247 = vmatpush2.msra.mxu0 0.0
    %1248 = vmatprep.subr.mxu0 0.0
    %1249 = vmatpush2.msra.mxu0 0.0
    %1250 = vmatprep.subr.mxu0 0.0
    %1251 = vmatpush2.msra.mxu0 0.0
    %1252 = vmatprep.subr.mxu0 0.0
    %1253 = vmatpush2.msra.mxu0 0.0
    %1254 = vmatprep.subr.mxu0 0.0
    %1255 = vmatpush2.msra.mxu0 0.0
    %1256 = vmatprep.subr.mxu0 0.0
    %1257 = vmatpush2.msra.mxu0 0.0
    %1258 = vmatprep.subr.mxu0 0.0
    %1259 = vmatpush2.msra.mxu0 0.0
    %1260 = vmatprep.subr.mxu0 0.0
    %1261 = vmatpush2.msra.mxu0 0.0
    %1262 = vmatprep.subr.mxu0 0.0
    %1263 = vmatpush2.msra.mxu0 0.0
    %1264 = vmatprep.subr.mxu0 0.0
    %1265 = vmatpush2.msra.mxu0 0.0
    %1266 = vmatprep.subr.mxu0 0.0
    %1267 = vmatpush2.msra.mxu0 0.0
    %1268 = vmatprep.subr.mxu0 0.0
    %1269 = vmatpush2.msra.mxu0 0.0
    %1270 = vmatprep.subr.mxu0 0.0
    %1271 = vmatpush2.msra.mxu0 0.0
    %1272 = vmatprep.subr.mxu0 0.0
    %1273 = vmatpush2.msra.mxu0 0.0
    %1274 = vmatprep.subr.mxu0 0.0
    %1275 = vmatpush2.msra.mxu0 0.0
    %1276 = vmatprep.subr.mxu0 0.0
    %1277 = vmatpush2.msra.mxu0 0.0
    %1278 = vmatprep.mubr.f32.mxu0 0.0
    %1279 = vmatmul.mubr.f32.gmra.mxu0 %v1209
    %v1280 = vpop.f32.mrf.mxu0
    %v1281 = vadd.f32 0.0, %v1280
    %v1282 = vpop.f32.mrf.mxu0
    %v1283 = vadd.f32 0.0, %v1282
    %1284 = vdwg.mxu0
    %1285 = vmatprep.subr.mxu0 0.0
    %1286 = vmatpush1.msra.mxu0 %v539
    %1287 = vmatprep.subr.mxu0 0.0
    %1288 = vmatpush1.msra.mxu0 %v536
    %1289 = vmatprep.subr.mxu0 0.0
    %1290 = vmatpush1.msra.mxu0 %v533
    %1291 = vmatprep.subr.mxu0 0.0
    %1292 = vmatpush1.msra.mxu0 %v530
    %1293 = vmatprep.subr.mxu0 0.0
    %1294 = vmatpush1.msra.mxu0 %v527
    %1295 = vmatprep.subr.mxu0 0.0
    %1296 = vmatpush1.msra.mxu0 %v524
    %1297 = vmatprep.subr.mxu0 0.0
    %1298 = vmatpush1.msra.mxu0 %v521
    %1299 = vmatprep.subr.mxu0 0.0
    %1300 = vmatpush1.msra.mxu0 %v518
    %1301 = vmatprep.subr.mxu0 0.0
    %1302 = vmatpush1.msra.mxu0 %v515
    %1303 = vmatprep.subr.mxu0 0.0
    %1304 = vmatpush1.msra.mxu0 %v512
    %1305 = vmatprep.subr.mxu0 0.0
    %1306 = vmatpush1.msra.mxu0 %v509
    %1307 = vmatprep.subr.mxu0 0.0
    %1308 = vmatpush1.msra.mxu0 %v506
    %1309 = vmatprep.subr.mxu0 0.0
    %1310 = vmatpush1.msra.mxu0 %v503
    %1311 = vmatprep.subr.mxu0 0.0
    %1312 = vmatpush1.msra.mxu0 %v500
    %1313 = vmatprep.subr.mxu0 0.0
    %1314 = vmatpush1.msra.mxu0 %v497
    %1315 = vmatprep.subr.mxu0 0.0
    %1316 = vmatpush1.msra.mxu0 %v494
    %1317 = vmatprep.subr.mxu0 0.0
    %1318 = vmatpush2.msra.mxu0 0.0
    %1319 = vmatprep.subr.mxu0 0.0
    %1320 = vmatpush2.msra.mxu0 0.0
    %1321 = vmatprep.subr.mxu0 0.0
    %1322 = vmatpush2.msra.mxu0 0.0
    %1323 = vmatprep.subr.mxu0 0.0
    %1324 = vmatpush2.msra.mxu0 0.0
    %1325 = vmatprep.subr.mxu0 0.0
    %1326 = vmatpush2.msra.mxu0 0.0
    %1327 = vmatprep.subr.mxu0 0.0
    %1328 = vmatpush2.msra.mxu0 0.0
    %1329 = vmatprep.subr.mxu0 0.0
    %1330 = vmatpush2.msra.mxu0 0.0
    %1331 = vmatprep.subr.mxu0 0.0
    %1332 = vmatpush2.msra.mxu0 0.0
    %1333 = vmatprep.subr.mxu0 0.0
    %1334 = vmatpush2.msra.mxu0 0.0
    %1335 = vmatprep.subr.mxu0 0.0
    %1336 = vmatpush2.msra.mxu0 0.0
    %1337 = vmatprep.subr.mxu0 0.0
    %1338 = vmatpush2.msra.mxu0 0.0
    %1339 = vmatprep.subr.mxu0 0.0
    %1340 = vmatpush2.msra.mxu0 0.0
    %1341 = vmatprep.subr.mxu0 0.0
    %1342 = vmatpush2.msra.mxu0 0.0
    %1343 = vmatprep.subr.mxu0 0.0
    %1344 = vmatpush2.msra.mxu0 0.0
    %1345 = vmatprep.subr.mxu0 0.0
    %1346 = vmatpush2.msra.mxu0 0.0
    %1347 = vmatprep.subr.mxu0 0.0
    %1348 = vmatpush2.msra.mxu0 0.0
    %1349 = vmatprep.mubr.f32.mxu0 0.0
    %1350 = vmatmul.mubr.f32.gmra.mxu0 %v1209
    %v1351 = vpop.f32.mrf.mxu0
    %v1352 = vadd.f32 0.0, %v1351
    %v1353 = vpop.f32.mrf.mxu0
    %1354 = vdwg.mxu0
    %v1355 = vadd.f32 %v1211, %v1281
    %v1356 = vxor.u32 %v1355, 2147483648
    %v1357 = vmul.f32 %v1356, 1.442695
    %v1358 = vpow.pop %v1357
    %v1359 = vadd.f32 %v1358, 1.0
    %v1360 = vrcp.pop %v1359
    %v1361 = vmul.f32 1.0, %v1360
    %v1362 = vadd.f32 %v1212, %v1283
    %v1363 = vxor.u32 %v1362, 2147483648
    %v1364 = vmul.f32 %v1363, 1.442695
    %v1365 = vpow.pop %v1364
    %v1366 = vadd.f32 %v1365, 1.0
    %v1367 = vrcp.pop %v1366
    %v1368 = vmul.f32 1.0, %v1367
    %v1369 = vadd.f32 %v1352, %v545
    %v1370 = vmul.f32 %v1361, %v1369
    %v1371 = vadd.f32 %v1213, %v1370
    %v1372 = vtanh.pop %v1371
    %v1373 = vsub.f32 %v1209, %v1372
    %v1374 = vmul.f32 %v1368, %v1373
    %v1375 = vadd.f32 %v1372, %v1374
    %s1376 = scalar_lea.vmem [#allocation2], 120
    %v1377 = vld [vmem:[%s1376] sm:$0xff]
    %v1378 = vld [vmem:[%s1376 + $0x8] sm:$0xff]
    %v1379 = vld [vmem:[%s1376 + $0x10] sm:$0xff]
    %1380 = vmatprep.subr.mxu0 %v538
    %1381 = vmatpush1.msra.mxu0 %v537
    %1382 = vmatprep.subr.mxu0 %v535
    %1383 = vmatpush1.msra.mxu0 %v534
    %1384 = vmatprep.subr.mxu0 %v532
    %1385 = vmatpush1.msra.mxu0 %v531
    %1386 = vmatprep.subr.mxu0 %v529
    %1387 = vmatpush1.msra.mxu0 %v528
    %1388 = vmatprep.subr.mxu0 %v526
    %1389 = vmatpush1.msra.mxu0 %v525
    %1390 = vmatprep.subr.mxu0 %v523
    %1391 = vmatpush1.msra.mxu0 %v522
    %1392 = vmatprep.subr.mxu0 %v520
    %1393 = vmatpush1.msra.mxu0 %v519
    %1394 = vmatprep.subr.mxu0 %v517
    %1395 = vmatpush1.msra.mxu0 %v516
    %1396 = vmatprep.subr.mxu0 %v514
    %1397 = vmatpush1.msra.mxu0 %v513
    %1398 = vmatprep.subr.mxu0 %v511
    %1399 = vmatpush1.msra.mxu0 %v510
    %1400 = vmatprep.subr.mxu0 %v508
    %1401 = vmatpush1.msra.mxu0 %v507
    %1402 = vmatprep.subr.mxu0 %v505
    %1403 = vmatpush1.msra.mxu0 %v504
    %1404 = vmatprep.subr.mxu0 %v502
    %1405 = vmatpush1.msra.mxu0 %v501
    %1406 = vmatprep.subr.mxu0 %v499
    %1407 = vmatpush1.msra.mxu0 %v498
    %1408 = vmatprep.subr.mxu0 %v496
    %1409 = vmatpush1.msra.mxu0 %v495
    %1410 = vmatprep.subr.mxu0 %v493
    %1411 = vmatpush1.msra.mxu0 %v492
    %1412 = vmatprep.subr.mxu0 0.0
    %1413 = vmatpush2.msra.mxu0 0.0
    %1414 = vmatprep.subr.mxu0 0.0
    %1415 = vmatpush2.msra.mxu0 0.0
    %1416 = vmatprep.subr.mxu0 0.0
    %1417 = vmatpush2.msra.mxu0 0.0
    %1418 = vmatprep.subr.mxu0 0.0
    %1419 = vmatpush2.msra.mxu0 0.0
    %1420 = vmatprep.subr.mxu0 0.0
    %1421 = vmatpush2.msra.mxu0 0.0
    %1422 = vmatprep.subr.mxu0 0.0
    %1423 = vmatpush2.msra.mxu0 0.0
    %1424 = vmatprep.subr.mxu0 0.0
    %1425 = vmatpush2.msra.mxu0 0.0
    %1426 = vmatprep.subr.mxu0 0.0
    %1427 = vmatpush2.msra.mxu0 0.0
    %1428 = vmatprep.subr.mxu0 0.0
    %1429 = vmatpush2.msra.mxu0 0.0
    %1430 = vmatprep.subr.mxu0 0.0
    %1431 = vmatpush2.msra.mxu0 0.0
    %1432 = vmatprep.subr.mxu0 0.0
    %1433 = vmatpush2.msra.mxu0 0.0
    %1434 = vmatprep.subr.mxu0 0.0
    %1435 = vmatpush2.msra.mxu0 0.0
    %1436 = vmatprep.subr.mxu0 0.0
    %1437 = vmatpush2.msra.mxu0 0.0
    %1438 = vmatprep.subr.mxu0 0.0
    %1439 = vmatpush2.msra.mxu0 0.0
    %1440 = vmatprep.subr.mxu0 0.0
    %1441 = vmatpush2.msra.mxu0 0.0
    %1442 = vmatprep.subr.mxu0 0.0
    %1443 = vmatpush2.msra.mxu0 0.0
    %1444 = vmatprep.mubr.f32.mxu0 0.0
    %1445 = vmatmul.mubr.f32.gmra.mxu0 %v1375
    %v1446 = vpop.f32.mrf.mxu0
    %v1447 = vadd.f32 0.0, %v1446
    %v1448 = vpop.f32.mrf.mxu0
    %v1449 = vadd.f32 0.0, %v1448
    %1450 = vdwg.mxu0
    %1451 = vmatprep.subr.mxu0 0.0
    %1452 = vmatpush1.msra.mxu0 %v539
    %1453 = vmatprep.subr.mxu0 0.0
    %1454 = vmatpush1.msra.mxu0 %v536
    %1455 = vmatprep.subr.mxu0 0.0
    %1456 = vmatpush1.msra.mxu0 %v533
    %1457 = vmatprep.subr.mxu0 0.0
    %1458 = vmatpush1.msra.mxu0 %v530
    %1459 = vmatprep.subr.mxu0 0.0
    %1460 = vmatpush1.msra.mxu0 %v527
    %1461 = vmatprep.subr.mxu0 0.0
    %1462 = vmatpush1.msra.mxu0 %v524
    %1463 = vmatprep.subr.mxu0 0.0
    %1464 = vmatpush1.msra.mxu0 %v521
    %1465 = vmatprep.subr.mxu0 0.0
    %1466 = vmatpush1.msra.mxu0 %v518
    %1467 = vmatprep.subr.mxu0 0.0
    %1468 = vmatpush1.msra.mxu0 %v515
    %1469 = vmatprep.subr.mxu0 0.0
    %1470 = vmatpush1.msra.mxu0 %v512
    %1471 = vmatprep.subr.mxu0 0.0
    %1472 = vmatpush1.msra.mxu0 %v509
    %1473 = vmatprep.subr.mxu0 0.0
    %1474 = vmatpush1.msra.mxu0 %v506
    %1475 = vmatprep.subr.mxu0 0.0
    %1476 = vmatpush1.msra.mxu0 %v503
    %1477 = vmatprep.subr.mxu0 0.0
    %1478 = vmatpush1.msra.mxu0 %v500
    %1479 = vmatprep.subr.mxu0 0.0
    %1480 = vmatpush1.msra.mxu0 %v497
    %1481 = vmatprep.subr.mxu0 0.0
    %1482 = vmatpush1.msra.mxu0 %v494
    %1483 = vmatprep.subr.mxu0 0.0
    %1484 = vmatpush2.msra.mxu0 0.0
    %1485 = vmatprep.subr.mxu0 0.0
    %1486 = vmatpush2.msra.mxu0 0.0
    %1487 = vmatprep.subr.mxu0 0.0
    %1488 = vmatpush2.msra.mxu0 0.0
    %1489 = vmatprep.subr.mxu0 0.0
    %1490 = vmatpush2.msra.mxu0 0.0
    %1491 = vmatprep.subr.mxu0 0.0
    %1492 = vmatpush2.msra.mxu0 0.0
    %1493 = vmatprep.subr.mxu0 0.0
    %1494 = vmatpush2.msra.mxu0 0.0
    %1495 = vmatprep.subr.mxu0 0.0
    %1496 = vmatpush2.msra.mxu0 0.0
    %1497 = vmatprep.subr.mxu0 0.0
    %1498 = vmatpush2.msra.mxu0 0.0
    %1499 = vmatprep.subr.mxu0 0.0
    %1500 = vmatpush2.msra.mxu0 0.0
    %1501 = vmatprep.subr.mxu0 0.0
    %1502 = vmatpush2.msra.mxu0 0.0
    %1503 = vmatprep.subr.mxu0 0.0
    %1504 = vmatpush2.msra.mxu0 0.0
    %1505 = vmatprep.subr.mxu0 0.0
    %1506 = vmatpush2.msra.mxu0 0.0
    %1507 = vmatprep.subr.mxu0 0.0
    %1508 = vmatpush2.msra.mxu0 0.0
    %1509 = vmatprep.subr.mxu0 0.0
    %1510 = vmatpush2.msra.mxu0 0.0
    %1511 = vmatprep.subr.mxu0 0.0
    %1512 = vmatpush2.msra.mxu0 0.0
    %1513 = vmatprep.subr.mxu0 0.0
    %1514 = vmatpush2.msra.mxu0 0.0
    %1515 = vmatprep.mubr.f32.mxu0 0.0
    %1516 = vmatmul.mubr.f32.gmra.mxu0 %v1375
    %v1517 = vpop.f32.mrf.mxu0
    %v1518 = vadd.f32 0.0, %v1517
    %v1519 = vpop.f32.mrf.mxu0
    %1520 = vdwg.mxu0
    %v1521 = vadd.f32 %v1377, %v1447
    %v1522 = vxor.u32 %v1521, 2147483648
    %v1523 = vmul.f32 %v1522, 1.442695
    %v1524 = vpow.pop %v1523
    %v1525 = vadd.f32 %v1524, 1.0
    %v1526 = vrcp.pop %v1525
    %v1527 = vmul.f32 1.0, %v1526
    %v1528 = vadd.f32 %v1378, %v1449
    %v1529 = vxor.u32 %v1528, 2147483648
    %v1530 = vmul.f32 %v1529, 1.442695
    %v1531 = vpow.pop %v1530
    %v1532 = vadd.f32 %v1531, 1.0
    %v1533 = vrcp.pop %v1532
    %v1534 = vmul.f32 1.0, %v1533
    %v1535 = vadd.f32 %v1518, %v545
    %v1536 = vmul.f32 %v1527, %v1535
    %v1537 = vadd.f32 %v1379, %v1536
    %v1538 = vtanh.pop %v1537
    %v1539 = vsub.f32 %v1375, %v1538
    %v1540 = vmul.f32 %v1534, %v1539
    %v1541 = vadd.f32 %v1538, %v1540
    %s1542 = scalar_lea.vmem [#allocation2], 144
    %v1543 = vld [vmem:[%s1542] sm:$0xff]
    %v1544 = vld [vmem:[%s1542 + $0x8] sm:$0xff]
    %v1545 = vld [vmem:[%s1542 + $0x10] sm:$0xff]
    %1546 = vmatprep.subr.mxu0 %v538
    %1547 = vmatpush1.msra.mxu0 %v537
    %1548 = vmatprep.subr.mxu0 %v535
    %1549 = vmatpush1.msra.mxu0 %v534
    %1550 = vmatprep.subr.mxu0 %v532
    %1551 = vmatpush1.msra.mxu0 %v531
    %1552 = vmatprep.subr.mxu0 %v529
    %1553 = vmatpush1.msra.mxu0 %v528
    %1554 = vmatprep.subr.mxu0 %v526
    %1555 = vmatpush1.msra.mxu0 %v525
    %1556 = vmatprep.subr.mxu0 %v523
    %1557 = vmatpush1.msra.mxu0 %v522
    %1558 = vmatprep.subr.mxu0 %v520
    %1559 = vmatpush1.msra.mxu0 %v519
    %1560 = vmatprep.subr.mxu0 %v517
    %1561 = vmatpush1.msra.mxu0 %v516
    %1562 = vmatprep.subr.mxu0 %v514
    %1563 = vmatpush1.msra.mxu0 %v513
    %1564 = vmatprep.subr.mxu0 %v511
    %1565 = vmatpush1.msra.mxu0 %v510
    %1566 = vmatprep.subr.mxu0 %v508
    %1567 = vmatpush1.msra.mxu0 %v507
    %1568 = vmatprep.subr.mxu0 %v505
    %1569 = vmatpush1.msra.mxu0 %v504
    %1570 = vmatprep.subr.mxu0 %v502
    %1571 = vmatpush1.msra.mxu0 %v501
    %1572 = vmatprep.subr.mxu0 %v499
    %1573 = vmatpush1.msra.mxu0 %v498
    %1574 = vmatprep.subr.mxu0 %v496
    %1575 = vmatpush1.msra.mxu0 %v495
    %1576 = vmatprep.subr.mxu0 %v493
    %1577 = vmatpush1.msra.mxu0 %v492
    %1578 = vmatprep.subr.mxu0 0.0
    %1579 = vmatpush2.msra.mxu0 0.0
    %1580 = vmatprep.subr.mxu0 0.0
    %1581 = vmatpush2.msra.mxu0 0.0
    %1582 = vmatprep.subr.mxu0 0.0
    %1583 = vmatpush2.msra.mxu0 0.0
    %1584 = vmatprep.subr.mxu0 0.0
    %1585 = vmatpush2.msra.mxu0 0.0
    %1586 = vmatprep.subr.mxu0 0.0
    %1587 = vmatpush2.msra.mxu0 0.0
    %1588 = vmatprep.subr.mxu0 0.0
    %1589 = vmatpush2.msra.mxu0 0.0
    %1590 = vmatprep.subr.mxu0 0.0
    %1591 = vmatpush2.msra.mxu0 0.0
    %1592 = vmatprep.subr.mxu0 0.0
    %1593 = vmatpush2.msra.mxu0 0.0
    %1594 = vmatprep.subr.mxu0 0.0
    %1595 = vmatpush2.msra.mxu0 0.0
    %1596 = vmatprep.subr.mxu0 0.0
    %1597 = vmatpush2.msra.mxu0 0.0
    %1598 = vmatprep.subr.mxu0 0.0
    %1599 = vmatpush2.msra.mxu0 0.0
    %1600 = vmatprep.subr.mxu0 0.0
    %1601 = vmatpush2.msra.mxu0 0.0
    %1602 = vmatprep.subr.mxu0 0.0
    %1603 = vmatpush2.msra.mxu0 0.0
    %1604 = vmatprep.subr.mxu0 0.0
    %1605 = vmatpush2.msra.mxu0 0.0
    %1606 = vmatprep.subr.mxu0 0.0
    %1607 = vmatpush2.msra.mxu0 0.0
    %1608 = vmatprep.subr.mxu0 0.0
    %1609 = vmatpush2.msra.mxu0 0.0
    %1610 = vmatprep.mubr.f32.mxu0 0.0
    %1611 = vmatmul.mubr.f32.gmra.mxu0 %v1541
    %v1612 = vpop.f32.mrf.mxu0
    %v1613 = vadd.f32 0.0, %v1612
    %v1614 = vpop.f32.mrf.mxu0
    %v1615 = vadd.f32 0.0, %v1614
    %1616 = vdwg.mxu0
    %1617 = vmatprep.subr.mxu0 0.0
    %1618 = vmatpush1.msra.mxu0 %v539
    %1619 = vmatprep.subr.mxu0 0.0
    %1620 = vmatpush1.msra.mxu0 %v536
    %1621 = vmatprep.subr.mxu0 0.0
    %1622 = vmatpush1.msra.mxu0 %v533
    %1623 = vmatprep.subr.mxu0 0.0
    %1624 = vmatpush1.msra.mxu0 %v530
    %1625 = vmatprep.subr.mxu0 0.0
    %1626 = vmatpush1.msra.mxu0 %v527
    %1627 = vmatprep.subr.mxu0 0.0
    %1628 = vmatpush1.msra.mxu0 %v524
    %1629 = vmatprep.subr.mxu0 0.0
    %1630 = vmatpush1.msra.mxu0 %v521
    %1631 = vmatprep.subr.mxu0 0.0
    %1632 = vmatpush1.msra.mxu0 %v518
    %1633 = vmatprep.subr.mxu0 0.0
    %1634 = vmatpush1.msra.mxu0 %v515
    %1635 = vmatprep.subr.mxu0 0.0
    %1636 = vmatpush1.msra.mxu0 %v512
    %1637 = vmatprep.subr.mxu0 0.0
    %1638 = vmatpush1.msra.mxu0 %v509
    %1639 = vmatprep.subr.mxu0 0.0
    %1640 = vmatpush1.msra.mxu0 %v506
    %1641 = vmatprep.subr.mxu0 0.0
    %1642 = vmatpush1.msra.mxu0 %v503
    %1643 = vmatprep.subr.mxu0 0.0
    %1644 = vmatpush1.msra.mxu0 %v500
    %1645 = vmatprep.subr.mxu0 0.0
    %1646 = vmatpush1.msra.mxu0 %v497
    %1647 = vmatprep.subr.mxu0 0.0
    %1648 = vmatpush1.msra.mxu0 %v494
    %1649 = vmatprep.subr.mxu0 0.0
    %1650 = vmatpush2.msra.mxu0 0.0
    %1651 = vmatprep.subr.mxu0 0.0
    %1652 = vmatpush2.msra.mxu0 0.0
    %1653 = vmatprep.subr.mxu0 0.0
    %1654 = vmatpush2.msra.mxu0 0.0
    %1655 = vmatprep.subr.mxu0 0.0
    %1656 = vmatpush2.msra.mxu0 0.0
    %1657 = vmatprep.subr.mxu0 0.0
    %1658 = vmatpush2.msra.mxu0 0.0
    %1659 = vmatprep.subr.mxu0 0.0
    %1660 = vmatpush2.msra.mxu0 0.0
    %1661 = vmatprep.subr.mxu0 0.0
    %1662 = vmatpush2.msra.mxu0 0.0
    %1663 = vmatprep.subr.mxu0 0.0
    %1664 = vmatpush2.msra.mxu0 0.0
    %1665 = vmatprep.subr.mxu0 0.0
    %1666 = vmatpush2.msra.mxu0 0.0
    %1667 = vmatprep.subr.mxu0 0.0
    %1668 = vmatpush2.msra.mxu0 0.0
    %1669 = vmatprep.subr.mxu0 0.0
    %1670 = vmatpush2.msra.mxu0 0.0
    %1671 = vmatprep.subr.mxu0 0.0
    %1672 = vmatpush2.msra.mxu0 0.0
    %1673 = vmatprep.subr.mxu0 0.0
    %1674 = vmatpush2.msra.mxu0 0.0
    %1675 = vmatprep.subr.mxu0 0.0
    %1676 = vmatpush2.msra.mxu0 0.0
    %1677 = vmatprep.subr.mxu0 0.0
    %1678 = vmatpush2.msra.mxu0 0.0
    %1679 = vmatprep.subr.mxu0 0.0
    %1680 = vmatpush2.msra.mxu0 0.0
    %1681 = vmatprep.mubr.f32.mxu0 0.0
    %1682 = vmatmul.mubr.f32.gmra.mxu0 %v1541
    %v1683 = vpop.f32.mrf.mxu0
    %v1684 = vadd.f32 0.0, %v1683
    %v1685 = vpop.f32.mrf.mxu0
    %1686 = vdwg.mxu0
    %v1687 = vadd.f32 %v1543, %v1613
    %v1688 = vxor.u32 %v1687, 2147483648
    %v1689 = vmul.f32 %v1688, 1.442695
    %v1690 = vpow.pop %v1689
    %v1691 = vadd.f32 %v1690, 1.0
    %v1692 = vrcp.pop %v1691
    %v1693 = vmul.f32 1.0, %v1692
    %v1694 = vadd.f32 %v1544, %v1615
    %v1695 = vxor.u32 %v1694, 2147483648
    %v1696 = vmul.f32 %v1695, 1.442695
    %v1697 = vpow.pop %v1696
    %v1698 = vadd.f32 %v1697, 1.0
    %v1699 = vrcp.pop %v1698
    %v1700 = vmul.f32 1.0, %v1699
    %v1701 = vadd.f32 %v1684, %v545
    %v1702 = vmul.f32 %v1693, %v1701
    %v1703 = vadd.f32 %v1545, %v1702
    %v1704 = vtanh.pop %v1703
    %v1705 = vsub.f32 %v1541, %v1704
    %v1706 = vmul.f32 %v1700, %v1705
    %v1707 = vadd.f32 %v1704, %v1706
    %s1708 = scalar_lea.vmem [#allocation2], 168
    %v1709 = vld [vmem:[%s1708] sm:$0xff]
    %v1710 = vld [vmem:[%s1708 + $0x8] sm:$0xff]
    %v1711 = vld [vmem:[%s1708 + $0x10] sm:$0xff]
    %1712 = vmatprep.subr.mxu0 %v538
    %1713 = vmatpush1.msra.mxu0 %v537
    %1714 = vmatprep.subr.mxu0 %v535
    %1715 = vmatpush1.msra.mxu0 %v534
    %1716 = vmatprep.subr.mxu0 %v532
    %1717 = vmatpush1.msra.mxu0 %v531
    %1718 = vmatprep.subr.mxu0 %v529
    %1719 = vmatpush1.msra.mxu0 %v528
    %1720 = vmatprep.subr.mxu0 %v526
    %1721 = vmatpush1.msra.mxu0 %v525
    %1722 = vmatprep.subr.mxu0 %v523
    %1723 = vmatpush1.msra.mxu0 %v522
    %1724 = vmatprep.subr.mxu0 %v520
    %1725 = vmatpush1.msra.mxu0 %v519
    %1726 = vmatprep.subr.mxu0 %v517
    %1727 = vmatpush1.msra.mxu0 %v516
    %1728 = vmatprep.subr.mxu0 %v514
    %1729 = vmatpush1.msra.mxu0 %v513
    %1730 = vmatprep.subr.mxu0 %v511
    %1731 = vmatpush1.msra.mxu0 %v510
    %1732 = vmatprep.subr.mxu0 %v508
    %1733 = vmatpush1.msra.mxu0 %v507
    %1734 = vmatprep.subr.mxu0 %v505
    %1735 = vmatpush1.msra.mxu0 %v504
    %1736 = vmatprep.subr.mxu0 %v502
    %1737 = vmatpush1.msra.mxu0 %v501
    %1738 = vmatprep.subr.mxu0 %v499
    %1739 = vmatpush1.msra.mxu0 %v498
    %1740 = vmatprep.subr.mxu0 %v496
    %1741 = vmatpush1.msra.mxu0 %v495
    %1742 = vmatprep.subr.mxu0 %v493
    %1743 = vmatpush1.msra.mxu0 %v492
    %1744 = vmatprep.subr.mxu0 0.0
    %1745 = vmatpush2.msra.mxu0 0.0
    %1746 = vmatprep.subr.mxu0 0.0
    %1747 = vmatpush2.msra.mxu0 0.0
    %1748 = vmatprep.subr.mxu0 0.0
    %1749 = vmatpush2.msra.mxu0 0.0
    %1750 = vmatprep.subr.mxu0 0.0
    %1751 = vmatpush2.msra.mxu0 0.0
    %1752 = vmatprep.subr.mxu0 0.0
    %1753 = vmatpush2.msra.mxu0 0.0
    %1754 = vmatprep.subr.mxu0 0.0
    %1755 = vmatpush2.msra.mxu0 0.0
    %1756 = vmatprep.subr.mxu0 0.0
    %1757 = vmatpush2.msra.mxu0 0.0
    %1758 = vmatprep.subr.mxu0 0.0
    %1759 = vmatpush2.msra.mxu0 0.0
    %1760 = vmatprep.subr.mxu0 0.0
    %1761 = vmatpush2.msra.mxu0 0.0
    %1762 = vmatprep.subr.mxu0 0.0
    %1763 = vmatpush2.msra.mxu0 0.0
    %1764 = vmatprep.subr.mxu0 0.0
    %1765 = vmatpush2.msra.mxu0 0.0
    %1766 = vmatprep.subr.mxu0 0.0
    %1767 = vmatpush2.msra.mxu0 0.0
    %1768 = vmatprep.subr.mxu0 0.0
    %1769 = vmatpush2.msra.mxu0 0.0
    %1770 = vmatprep.subr.mxu0 0.0
    %1771 = vmatpush2.msra.mxu0 0.0
    %1772 = vmatprep.subr.mxu0 0.0
    %1773 = vmatpush2.msra.mxu0 0.0
    %1774 = vmatprep.subr.mxu0 0.0
    %1775 = vmatpush2.msra.mxu0 0.0
    %1776 = vmatprep.mubr.f32.mxu0 0.0
    %1777 = vmatmul.mubr.f32.gmra.mxu0 %v1707
    %v1778 = vpop.f32.mrf.mxu0
    %v1779 = vadd.f32 0.0, %v1778
    %v1780 = vpop.f32.mrf.mxu0
    %v1781 = vadd.f32 0.0, %v1780
    %1782 = vdwg.mxu0
    %1783 = vmatprep.subr.mxu0 0.0
    %1784 = vmatpush1.msra.mxu0 %v539
    %1785 = vmatprep.subr.mxu0 0.0
    %1786 = vmatpush1.msra.mxu0 %v536
    %1787 = vmatprep.subr.mxu0 0.0
    %1788 = vmatpush1.msra.mxu0 %v533
    %1789 = vmatprep.subr.mxu0 0.0
    %1790 = vmatpush1.msra.mxu0 %v530
    %1791 = vmatprep.subr.mxu0 0.0
    %1792 = vmatpush1.msra.mxu0 %v527
    %1793 = vmatprep.subr.mxu0 0.0
    %1794 = vmatpush1.msra.mxu0 %v524
    %1795 = vmatprep.subr.mxu0 0.0
    %1796 = vmatpush1.msra.mxu0 %v521
    %1797 = vmatprep.subr.mxu0 0.0
    %1798 = vmatpush1.msra.mxu0 %v518
    %1799 = vmatprep.subr.mxu0 0.0
    %1800 = vmatpush1.msra.mxu0 %v515
    %1801 = vmatprep.subr.mxu0 0.0
    %1802 = vmatpush1.msra.mxu0 %v512
    %1803 = vmatprep.subr.mxu0 0.0
    %1804 = vmatpush1.msra.mxu0 %v509
    %1805 = vmatprep.subr.mxu0 0.0
    %1806 = vmatpush1.msra.mxu0 %v506
    %1807 = vmatprep.subr.mxu0 0.0
    %1808 = vmatpush1.msra.mxu0 %v503
    %1809 = vmatprep.subr.mxu0 0.0
    %1810 = vmatpush1.msra.mxu0 %v500
    %1811 = vmatprep.subr.mxu0 0.0
    %1812 = vmatpush1.msra.mxu0 %v497
    %1813 = vmatprep.subr.mxu0 0.0
    %1814 = vmatpush1.msra.mxu0 %v494
    %1815 = vmatprep.subr.mxu0 0.0
    %1816 = vmatpush2.msra.mxu0 0.0
    %1817 = vmatprep.subr.mxu0 0.0
    %1818 = vmatpush2.msra.mxu0 0.0
    %1819 = vmatprep.subr.mxu0 0.0
    %1820 = vmatpush2.msra.mxu0 0.0
    %1821 = vmatprep.subr.mxu0 0.0
    %1822 = vmatpush2.msra.mxu0 0.0
    %1823 = vmatprep.subr.mxu0 0.0
    %1824 = vmatpush2.msra.mxu0 0.0
    %1825 = vmatprep.subr.mxu0 0.0
    %1826 = vmatpush2.msra.mxu0 0.0
    %1827 = vmatprep.subr.mxu0 0.0
    %1828 = vmatpush2.msra.mxu0 0.0
    %1829 = vmatprep.subr.mxu0 0.0
    %1830 = vmatpush2.msra.mxu0 0.0
    %1831 = vmatprep.subr.mxu0 0.0
    %1832 = vmatpush2.msra.mxu0 0.0
    %1833 = vmatprep.subr.mxu0 0.0
    %1834 = vmatpush2.msra.mxu0 0.0
    %1835 = vmatprep.subr.mxu0 0.0
    %1836 = vmatpush2.msra.mxu0 0.0
    %1837 = vmatprep.subr.mxu0 0.0
    %1838 = vmatpush2.msra.mxu0 0.0
    %1839 = vmatprep.subr.mxu0 0.0
    %1840 = vmatpush2.msra.mxu0 0.0
    %1841 = vmatprep.subr.mxu0 0.0
    %1842 = vmatpush2.msra.mxu0 0.0
    %1843 = vmatprep.subr.mxu0 0.0
    %1844 = vmatpush2.msra.mxu0 0.0
    %1845 = vmatprep.subr.mxu0 0.0
    %1846 = vmatpush2.msra.mxu0 0.0
    %1847 = vmatprep.mubr.f32.mxu0 0.0
    %1848 = vmatmul.mubr.f32.gmra.mxu0 %v1707
    %v1849 = vpop.f32.mrf.mxu0
    %v1850 = vadd.f32 0.0, %v1849
    %v1851 = vpop.f32.mrf.mxu0
    %1852 = vdwg.mxu0
    %v1853 = vadd.f32 %v1709, %v1779
    %v1854 = vxor.u32 %v1853, 2147483648
    %v1855 = vmul.f32 %v1854, 1.442695
    %v1856 = vpow.pop %v1855
    %v1857 = vadd.f32 %v1856, 1.0
    %v1858 = vrcp.pop %v1857
    %v1859 = vmul.f32 1.0, %v1858
    %v1860 = vadd.f32 %v1710, %v1781
    %v1861 = vxor.u32 %v1860, 2147483648
    %v1862 = vmul.f32 %v1861, 1.442695
    %v1863 = vpow.pop %v1862
    %v1864 = vadd.f32 %v1863, 1.0
    %v1865 = vrcp.pop %v1864
    %v1866 = vmul.f32 1.0, %v1865
    %v1867 = vadd.f32 %v1850, %v545
    %v1868 = vmul.f32 %v1859, %v1867
    %v1869 = vadd.f32 %v1711, %v1868
    %v1870 = vtanh.pop %v1869
    %v1871 = vsub.f32 %v1707, %v1870
    %v1872 = vmul.f32 %v1866, %v1871
    %v1873 = vadd.f32 %v1870, %v1872
    %1874 = vst [vmem:[#allocation8] sm:$0xff] %v1873
    // Predicated region
    $region26: #{tpu_custom_call.1} parent=1 // pred_check
      _
    $region27: #{tpu_custom_call.1} parent=1 // pred_check_branch
      %1876 = sbr.rel (0) target = $region29
    $region28: #{tpu_custom_call.1} parent=1 // pred_region
      %s1878 = ssub.s32 128, 128
      %1879 = vsyncadd [#allocation5], %s1878
      %s1881 = sshll.u32 [#allocation8], 4
      %s1882 = int_to_ptr.vmem [resolvable:$true] %s1881
      %1884 = dma.vmem_to_hbm [thread:$0]  %s1882, 128, %s4, [#allocation5]
    $region29: #{tpu_custom_call.1} parent=1 // pred_fallthru
      _
    // Predicated region
    $region30: #{tpu_custom_call.1} parent=1 // pred_check
      _
    $region31: #{tpu_custom_call.1} parent=1 // pred_check_branch
      %1886 = sbr.rel (0) target = $region33
    $region32: #{tpu_custom_call.1} parent=1 // pred_region
      %1887 = dma.done [#allocation5], 128
    $region33: #{tpu_custom_call.1} parent=1 // pred_fallthru
      _
    %1888 = vsyncpa [#allocation4], 1
    %1889 = vsyncpa [#allocation7], 1
    %1890 = vsyncpa [#allocation5], 1

</llo_original>
